<compile_context>
chip_gen: v6e
topology: v6e:2x2x1
jax: 0.10.0
libtpu: 0.0.40
codegen_flags: <defaults>
</compile_context>

<pallas_src>
import itertools
import math

import numpy as np
import jax
import jax.numpy as jnp
from jax.experimental import pallas as pl
from jax.experimental.pallas import tpu as pltpu

# ----------------------------- configuration (small shapes) -----------------------------
NUM_LINEARS = 2          # num_linears (mlp_hodge / mlp_rank2 depth) -- kernel assumes 2 layers
C_I = 3                  # input_dim  (number of channels / BaselineBlocks)
HID = 8                  # hidden_dim of each BaselineBlock MLP
C_O = 4                  # conv_output_dim
N_NODES = 6              # N
D_MIN, D_MAX = 3, 4
B = 2                    # batch

E = N_NODES * (N_NODES - 1) // 2                                     # nb_edges = C(N,2) = 15
K = sum(math.comb(N_NODES, d) for d in range(D_MIN, D_MAX + 1))      # rank-2 cells   = 35
HM = 2 * max(C_I, C_O)                                               # hidden_dim_mlp = 8
BE = B * E                                                           # batch-folded rows = 30
HODGE_W = C_O * E                                                    # 60
OUT_W = 128                                                          # lane-dense packed output width

# SMEM offsets for the tiny mlp_rank2 parameters (wr1, br1, wr2, br2 flattened)
OFF_WR1 = 0
OFF_BR1 = C_I * HM
OFF_WR2 = C_I * HM + HM
OFF_BR2 = C_I * HM + 2 * HM
RHEAD_LEN = OFF_BR2 + 1                                              # 41 scalars

# edge / rank-2 cell enumeration (canonical combination order), used for mask helpers.
# TODO(synk): mask_hodge_adjs / mask_rank2 / get_rank2_dim helpers are not provided in the
# prompt; re-implemented here as node-flag-derived edge masks (both endpoints present) and
# cell masks (all member nodes present).
EDGES = np.array(list(itertools.combinations(range(N_NODES), 2)), dtype=np.int32)   # (E, 2)
_CELLS = [c for d in range(D_MIN, D_MAX + 1) for c in itertools.combinations(range(N_NODES), d)]
CELL_MEMBERSHIP = np.zeros((K, N_NODES), dtype=bool)
for _ci, _c in enumerate(_CELLS):
    CELL_MEMBERSHIP[_ci, list(_c)] = True
CELL_MEMBERSHIP = jnp.asarray(CELL_MEMBERSHIP)
EDGES_J = jnp.asarray(EDGES)


def _elu(x):
    # torch.nn.functional.elu (alpha=1); clamp the exp argument so the unselected branch
    # cannot overflow for large positive activations.
    return jnp.where(x > 0, x, jnp.exp(jnp.minimum(x, 0.0)) - 1.0)


# ----------------------------------- fused Pallas kernel ---------------------------------
def hodge_baseline_fused_kernel(x_ref, r2_ref, w1bd_ref, w2bd_ref, wh1k_ref, wh2k_ref,
                                bias_ref, mask_ref, rhead_ref, out_ref):
    """Whole batch, all channels, both heads in one invocation (grid=())."""
    f32 = jnp.float32
    x = x_ref[...]                 # (BE, C_I*E)  = (30, 45)  channel-concat hodge adj
    r2 = r2_ref[...]               # (BE, K)      = (30, 35)  batch-folded rank2
    biases = bias_ref[...]         # (4, HM*E)    = (4, 120)
    masks = mask_ref[...]          # (BE, E+K)    = (30, 50)

    b1 = biases[0:1, :C_I * HID]                               # (1, 24)
    b2 = biases[1:2, :C_I * E]                                 # (1, 45)
    bh1 = biases[2:3, :HM * E]                                 # (1, 120)
    bh2 = biases[3:4, :HODGE_W]                                # (1, 60)

    # ---- stage 1: all C_I BaselineBlock MLPs as two block-diagonal MXU dots ----
    h = _elu(jnp.dot(x, w1bd_ref[...], preferred_element_type=f32) + b1)     # (BE, C_I*HID)
    t = jnp.tanh(jnp.dot(h, w2bd_ref[...], preferred_element_type=f32) + b2)  # (BE, C_I*E)

    # per-batch / per-channel pieces: symmetrize and bmm with this batch's rank2
    hs_rows = []                                  # B rows of (E, C_I*E)
    rk_parts = [[] for _ in range(C_I)]           # per channel, per batch (E, K)
    for b in range(B):
        tb = t[b * E:(b + 1) * E, :]              # (E, C_I*E)
        r2b = r2[b * E:(b + 1) * E, :]            # (E, K)
        sym = []
        for k in range(C_I):
            t_bk = tb[:, k * E:(k + 1) * E]       # (E, E)
            sym.append(0.5 * (t_bk + t_bk.T))     # BaselineBlock hodge output
            rk_parts[k].append(jnp.dot(t_bk, r2b, preferred_element_type=f32))  # torch.bmm
        hs_rows.append(jnp.concatenate(sym, axis=1))
    hs_cat = jnp.concatenate(hs_rows, axis=0)                      # (BE, C_I*E)
    rk = [jnp.concatenate(p, axis=0) for p in rk_parts]            # C_I x (BE, K)

    # ---- stage 2: mlp_hodge head as lane-dense kron(w, I_E) MXU dots ----
    hid = _elu(jnp.dot(hs_cat, wh1k_ref[...], preferred_element_type=f32) + bh1)   # (BE, HM*E)
    yh = jnp.dot(hid, wh2k_ref[...], preferred_element_type=f32) + bh2             # (BE, C_O*E)
    hmask = masks[:, :E]                                                           # (BE, E)
    yh = jnp.tanh(yh * jnp.concatenate([hmask] * C_O, axis=1))   # mask_hodge_adjs then tanh
    # final `out + out^T` symmetrization is done in the wrapper (exact torch semantics).

    # ---- stage 3: mlp_rank2 head as VPU broadcast-FMAs with SMEM scalar coefficients ----
    rmask = masks[:, E:E + K]                                                      # (BE, K)
    yr = None
    for hh in range(HM):
        a = rhead_ref[OFF_BR1 + hh] + rk[0] * rhead_ref[OFF_WR1 + hh]
        for k in range(1, C_I):
            a = a + rk[k] * rhead_ref[OFF_WR1 + k * HM + hh]
        a = _elu(a)
        c = rhead_ref[OFF_WR2 + hh] * a
        yr = c if yr is None else yr + c
    yr = (yr + rhead_ref[OFF_BR2]) * rmask                                         # mask_rank2

    # ---- lane-dense packed output: [hodge 60 | rank2 35 | zero pad 33] -> 128 lanes ----
    pad = jnp.zeros((BE, OUT_W - HODGE_W - K), f32)
    out_ref[...] = jnp.concatenate([yh, yr, pad], axis=1)


# ----------------------------------- wrapper ---------------------------------------------
def hodge_baseline_layer(hodge_adj, rank2, node_flags, params):
    (w1, b1, w2, b2, wh1, bh1, wh2, bh2, wr1, br1, wr2, br2) = params
    f32 = jnp.float32

    # --- masks derived from node flags (glue; see TODO above) ---
    edge_mask = node_flags[:, EDGES_J[:, 0]] * node_flags[:, EDGES_J[:, 1]]            # (B, E)
    cell_mask = jnp.prod(jnp.where(CELL_MEMBERSHIP[None], node_flags[:, None, :], 1.0),
                         axis=-1)                                                      # (B, K)
    hmask2d = (edge_mask[:, :, None] * edge_mask[:, None, :]).reshape(BE, E)
    rmask2d = (edge_mask[:, :, None] * cell_mask[:, None, :]).reshape(BE, K)
    masks = jnp.concatenate([hmask2d, rmask2d], axis=1).astype(f32)                    # (BE, E+K)

    # --- batch-folded activations: channel slabs along lanes for the block-diag dots ---
    x_cat = jnp.transpose(hodge_adj, (0, 2, 1, 3)).reshape(BE, C_I * E).astype(f32)    # (BE, C_I*E)
    r2_2d = rank2.reshape(BE, K).astype(f32)                                           # (BE, K)

    # --- BaselineBlock weights fused into block-diagonal matrices (tiny, host/XLA side) ---
    w1_bd = jax.scipy.linalg.block_diag(*[w1[k] for k in range(C_I)]).astype(f32)      # (C_I*E, C_I*HID)
    w2_bd = jax.scipy.linalg.block_diag(*[w2[k] for k in range(C_I)]).astype(f32)      # (C_I*HID, C_I*E)

    # --- mlp_hodge as kron(w, I_E) lane-dense matmul operands (contractions 45 and 120) ---
    eyeE = jnp.eye(E, dtype=f32)
    wh1k = jnp.kron(wh1.astype(f32), eyeE)                                             # (C_I*E, HM*E)
    wh2k = jnp.kron(wh2.astype(f32), eyeE)                                             # (HM*E, C_O*E)

    # --- all biases merged into one small VMEM array (cuts DMA fan-in) ---
    biases = jnp.zeros((4, HM * E), f32)
    biases = biases.at[0, :C_I * HID].set(b1.reshape(-1))
    biases = biases.at[1, :C_I * E].set(b2.reshape(-1))
    biases = biases.at[2, :].set(jnp.repeat(bh1.reshape(-1), E))
    biases = biases.at[3, :HODGE_W].set(jnp.repeat(bh2.reshape(-1), E))

    # --- mlp_rank2 parameters as one flat SMEM scalar vector ---
    rhead = jnp.concatenate([wr1.reshape(-1), br1.reshape(-1),
                             wr2.reshape(-1), br2.reshape(-1)]).astype(f32)            # (41,)

    vmem = pltpu.MemorySpace.VMEM
    smem = pltpu.MemorySpace.SMEM
    packed = pl.pallas_call(
        hodge_baseline_fused_kernel,
        out_shape=jax.ShapeDtypeStruct((BE, OUT_W), f32),
        in_specs=[pl.BlockSpec(memory_space=vmem)] * 8
                 + [pl.BlockSpec(memory_space=smem)],
        out_specs=pl.BlockSpec(memory_space=vmem),
    )(x_cat, r2_2d, w1_bd, w2_bd, wh1k, wh2k, biases, masks, rhead)

    # lane-dense (BE, 128) -> (B, C_O, E, E) and (B, E, K); explicit final symmetrization
    yh = packed[:, :HODGE_W].reshape(B, E, C_O, E).transpose(0, 2, 1, 3)
    hodge_out = yh + jnp.swapaxes(yh, -1, -2)
    rank2_out = packed[:, HODGE_W:HODGE_W + K].reshape(B, E, K)
    return hodge_out, rank2_out


# ------------------------------- pure-JAX reference --------------------------------------
def reference(hodge_adj, rank2, node_flags, params):
    (w1, b1, w2, b2, wh1, bh1, wh2, bh2, wr1, br1, wr2, br2) = params
    edge_mask = node_flags[:, EDGES_J[:, 0]] * node_flags[:, EDGES_J[:, 1]]
    cell_mask = jnp.prod(jnp.where(CELL_MEMBERSHIP[None], node_flags[:, None, :], 1.0), axis=-1)
    hs, rs = [], []
    for k in range(C_I):
        x = hodge_adj[:, k]
        h = _elu(jnp.einsum('bie,eh->bih', x, w1[k]) + b1[k])
        t = jnp.tanh(jnp.einsum('bih,he->bie', h, w2[k]) + b2[k])
        rs.append(jnp.einsum('bij,bjk->bik', t, rank2))
        hs.append(0.5 * (t + jnp.swapaxes(t, -1, -2)))
    hstack = jnp.stack(hs, axis=-1)                                   # (B,E,E,C_I)
    rstack = jnp.stack(rs, axis=-1)                                   # (B,E,K,C_I)
    hh = _elu(jnp.matmul(hstack, wh1) + bh1[0])
    hh = jnp.matmul(hh, wh2) + bh2[0]                                 # (B,E,E,C_O)
    hh = jnp.transpose(hh, (0, 3, 1, 2))                              # (B,C_O,E,E)
    hh = hh * edge_mask[:, None, :, None] * edge_mask[:, None, None, :]
    hh = jnp.tanh(hh)
    hh = hh + jnp.swapaxes(hh, -1, -2)
    rr = jnp.matmul(_elu(jnp.matmul(rstack, wr1) + br1[0]), wr2) + br2[0]  # (B,E,K,1)
    rr = rr[..., 0]
    rr = rr * edge_mask[:, :, None] * cell_mask[:, None, :]
    return hh, rr


# ----------------------------------------- main ------------------------------------------
if __name__ == "__main__":
    key = jax.random.PRNGKey(0)
    keys = jax.random.split(key, 16)
    scale = 0.1

    # deterministic synthetic parameters (shapes follow the module's __init__)
    w1 = jax.random.normal(keys[0], (C_I, E, HID), jnp.float32) * scale
    b1 = jax.random.normal(keys[1], (C_I, 1, HID), jnp.float32) * scale
    w2 = jax.random.normal(keys[2], (C_I, HID, E), jnp.float32) * scale
    b2 = jax.random.normal(keys[3], (C_I, 1, E), jnp.float32) * scale
    wh1 = jax.random.normal(keys[4], (C_I, HM), jnp.float32) * scale
    bh1 = jax.random.normal(keys[5], (1, HM), jnp.float32) * scale
    wh2 = jax.random.normal(keys[6], (HM, C_O), jnp.float32) * scale
    bh2 = jax.random.normal(keys[7], (1, C_O), jnp.float32) * scale
    wr1 = jax.random.normal(keys[8], (C_I, HM), jnp.float32) * scale
    br1 = jax.random.normal(keys[9], (1, HM), jnp.float32) * scale
    wr2 = jax.random.normal(keys[10], (HM, 1), jnp.float32) * scale
    br2 = jax.random.normal(keys[11], (1, 1), jnp.float32) * scale
    params = (w1, b1, w2, b2, wh1, bh1, wh2, bh2, wr1, br1, wr2, br2)

    hodge_adj = jax.random.normal(keys[12], (B, C_I, E, E), jnp.float32)
    rank2 = jax.random.normal(keys[13], (B, E, K), jnp.float32)
    node_flags = jnp.stack([
        jnp.array([1., 1., 1., 1., 0., 0.], jnp.float32),
        jnp.ones((N_NODES,), jnp.float32),
    ])

    hodge_out, rank2_out = jax.jit(hodge_baseline_layer)(hodge_adj, rank2, node_flags, params)
    jax.block_until_ready((hodge_out, rank2_out))

    ref_h, ref_r = reference(hodge_adj, rank2, node_flags, params)
    # DEFAULT matmul precision (per perf review) rounds MXU operands to bf16; 5e-3 gives a
    # comfortable margin over the resulting ~1e-3 worst-case deviation at these magnitudes
    # while still catching any structural error (which would be O(0.1)).
    np.testing.assert_allclose(np.asarray(hodge_out), np.asarray(ref_h), rtol=5e-3, atol=5e-3)
    np.testing.assert_allclose(np.asarray(rank2_out), np.asarray(ref_r), rtol=5e-3, atol=5e-3)

    print("KERNEL_OK")
</pallas_src>

<mosaic_0001>
module attributes {stable_mosaic.version = 11 : i64} {
  func.func @hodge_baseline_fused_kernel(%arg0: memref<30x45xf32, #tpu.memory_space<vmem>>, %arg1: memref<30x35xf32, #tpu.memory_space<vmem>>, %arg2: memref<45x24xf32, #tpu.memory_space<vmem>>, %arg3: memref<24x45xf32, #tpu.memory_space<vmem>>, %arg4: memref<45x120xf32, #tpu.memory_space<vmem>>, %arg5: memref<120x60xf32, #tpu.memory_space<vmem>>, %arg6: memref<4x120xf32, #tpu.memory_space<vmem>>, %arg7: memref<30x50xf32, #tpu.memory_space<vmem>>, %arg8: memref<41xf32, #tpu.memory_space<smem>>, %arg9: memref<30x128xf32, #tpu.memory_space<vmem>>) attributes {dimension_semantics = [], scalar_prefetch = 0 : i64, scratch_operands = 0 : i64, tpu.core_type = #tpu.core_type<tc>} {
    %c0 = arith.constant 0 : index
    %c0_0 = arith.constant 0 : index
    %0 = vector.load %arg0[%c0, %c0_0] : memref<30x45xf32, #tpu.memory_space<vmem>>, vector<30x45xf32>
    %c0_1 = arith.constant 0 : index
    %c0_2 = arith.constant 0 : index
    %1 = vector.load %arg1[%c0_1, %c0_2] : memref<30x35xf32, #tpu.memory_space<vmem>>, vector<30x35xf32>
    %c0_3 = arith.constant 0 : index
    %c0_4 = arith.constant 0 : index
    %2 = vector.load %arg6[%c0_3, %c0_4] : memref<4x120xf32, #tpu.memory_space<vmem>>, vector<4x120xf32>
    %c0_5 = arith.constant 0 : index
    %c0_6 = arith.constant 0 : index
    %3 = vector.load %arg7[%c0_5, %c0_6] : memref<30x50xf32, #tpu.memory_space<vmem>>, vector<30x50xf32>
    %4 = vector.extract_strided_slice %2 {offsets = [0, 0], sizes = [1, 24], strides = [1, 1]} : vector<4x120xf32> to vector<1x24xf32>
    %5 = vector.extract_strided_slice %2 {offsets = [1, 0], sizes = [1, 45], strides = [1, 1]} : vector<4x120xf32> to vector<1x45xf32>
    %6 = vector.extract_strided_slice %2 {offsets = [2, 0], sizes = [1, 120], strides = [1, 1]} : vector<4x120xf32> to vector<1x120xf32>
    %7 = vector.extract_strided_slice %2 {offsets = [3, 0], sizes = [1, 60], strides = [1, 1]} : vector<4x120xf32> to vector<1x60xf32>
    %c0_7 = arith.constant 0 : index
    %c0_8 = arith.constant 0 : index
    %8 = vector.load %arg2[%c0_7, %c0_8] : memref<45x24xf32, #tpu.memory_space<vmem>>, vector<45x24xf32>
    %cst = arith.constant dense<0.000000e+00> : vector<30x24xf32>
    %9 = tpu.matmul %0, %8, %cst {dimension_numbers = #tpu.dot_dimension_numbers<[1], [0], [0], [1], [0, 0, 1, 1], [], []>} : vector<30x45xf32>, vector<45x24xf32>, vector<30x24xf32> -> vector<30x24xf32>
    %10 = vector.broadcast %4 : vector<1x24xf32> to vector<30x24xf32>
    %11 = arith.addf %9, %10 : vector<30x24xf32>
    %cst_9 = arith.constant 0.000000e+00 : f32
    %12 = vector.broadcast %cst_9 : f32 to vector<30x24xf32>
    %13 = arith.cmpf ogt, %11, %12 : vector<30x24xf32>
    %cst_10 = arith.constant 0.000000e+00 : f32
    %14 = vector.broadcast %cst_10 : f32 to vector<30x24xf32>
    %15 = arith.minimumf %11, %14 : vector<30x24xf32>
    %16 = math.exp %15 : vector<30x24xf32>
    %cst_11 = arith.constant 1.000000e+00 : f32
    %17 = vector.broadcast %cst_11 : f32 to vector<30x24xf32>
    %18 = arith.subf %16, %17 : vector<30x24xf32>
    %19 = arith.select %13, %11, %18 : vector<30x24xi1>, vector<30x24xf32>
    %c0_12 = arith.constant 0 : index
    %c0_13 = arith.constant 0 : index
    %20 = vector.load %arg3[%c0_12, %c0_13] : memref<24x45xf32, #tpu.memory_space<vmem>>, vector<24x45xf32>
    %cst_14 = arith.constant dense<0.000000e+00> : vector<30x45xf32>
    %21 = tpu.matmul %19, %20, %cst_14 {dimension_numbers = #tpu.dot_dimension_numbers<[1], [0], [0], [1], [0, 0, 1, 1], [], []>} : vector<30x24xf32>, vector<24x45xf32>, vector<30x45xf32> -> vector<30x45xf32>
    %22 = vector.broadcast %5 : vector<1x45xf32> to vector<30x45xf32>
    %23 = arith.addf %21, %22 : vector<30x45xf32>
    %24 = math.tanh %23 : vector<30x45xf32>
    %25 = vector.extract_strided_slice %24 {offsets = [0, 0], sizes = [15, 45], strides = [1, 1]} : vector<30x45xf32> to vector<15x45xf32>
    %26 = vector.extract_strided_slice %1 {offsets = [0, 0], sizes = [15, 35], strides = [1, 1]} : vector<30x35xf32> to vector<15x35xf32>
    %27 = vector.extract_strided_slice %25 {offsets = [0, 0], sizes = [15, 15], strides = [1, 1]} : vector<15x45xf32> to vector<15x15xf32>
    %28 = tpu.transpose %27, [1, 0] : vector<15x15xf32> -> vector<15x15xf32>
    %29 = arith.addf %27, %28 : vector<15x15xf32>
    %cst_15 = arith.constant 5.000000e-01 : f32
    %30 = vector.broadcast %cst_15 : f32 to vector<15x15xf32>
    %31 = arith.mulf %30, %29 : vector<15x15xf32>
    %cst_16 = arith.constant dense<0.000000e+00> : vector<15x35xf32>
    %32 = tpu.matmul %27, %26, %cst_16 {dimension_numbers = #tpu.dot_dimension_numbers<[1], [0], [0], [1], [0, 0, 1, 1], [], []>} : vector<15x15xf32>, vector<15x35xf32>, vector<15x35xf32> -> vector<15x35xf32>
    %33 = vector.extract_strided_slice %25 {offsets = [0, 15], sizes = [15, 15], strides = [1, 1]} : vector<15x45xf32> to vector<15x15xf32>
    %34 = tpu.transpose %33, [1, 0] : vector<15x15xf32> -> vector<15x15xf32>
    %35 = arith.addf %33, %34 : vector<15x15xf32>
    %cst_17 = arith.constant 5.000000e-01 : f32
    %36 = vector.broadcast %cst_17 : f32 to vector<15x15xf32>
    %37 = arith.mulf %36, %35 : vector<15x15xf32>
    %cst_18 = arith.constant dense<0.000000e+00> : vector<15x35xf32>
    %38 = tpu.matmul %33, %26, %cst_18 {dimension_numbers = #tpu.dot_dimension_numbers<[1], [0], [0], [1], [0, 0, 1, 1], [], []>} : vector<15x15xf32>, vector<15x35xf32>, vector<15x35xf32> -> vector<15x35xf32>
    %39 = vector.extract_strided_slice %25 {offsets = [0, 30], sizes = [15, 15], strides = [1, 1]} : vector<15x45xf32> to vector<15x15xf32>
    %40 = tpu.transpose %39, [1, 0] : vector<15x15xf32> -> vector<15x15xf32>
    %41 = arith.addf %39, %40 : vector<15x15xf32>
    %cst_19 = arith.constant 5.000000e-01 : f32
    %42 = vector.broadcast %cst_19 : f32 to vector<15x15xf32>
    %43 = arith.mulf %42, %41 : vector<15x15xf32>
    %cst_20 = arith.constant dense<0.000000e+00> : vector<15x35xf32>
    %44 = tpu.matmul %39, %26, %cst_20 {dimension_numbers = #tpu.dot_dimension_numbers<[1], [0], [0], [1], [0, 0, 1, 1], [], []>} : vector<15x15xf32>, vector<15x35xf32>, vector<15x35xf32> -> vector<15x35xf32>
    %45 = tpu.concatenate %31, %37, %43 in 1 : vector<15x15xf32>, vector<15x15xf32>, vector<15x15xf32> -> vector<15x45xf32>
    %46 = vector.extract_strided_slice %24 {offsets = [15, 0], sizes = [15, 45], strides = [1, 1]} : vector<30x45xf32> to vector<15x45xf32>
    %47 = vector.extract_strided_slice %1 {offsets = [15, 0], sizes = [15, 35], strides = [1, 1]} : vector<30x35xf32> to vector<15x35xf32>
    %48 = vector.extract_strided_slice %46 {offsets = [0, 0], sizes = [15, 15], strides = [1, 1]} : vector<15x45xf32> to vector<15x15xf32>
    %49 = tpu.transpose %48, [1, 0] : vector<15x15xf32> -> vector<15x15xf32>
    %50 = arith.addf %48, %49 : vector<15x15xf32>
    %cst_21 = arith.constant 5.000000e-01 : f32
    %51 = vector.broadcast %cst_21 : f32 to vector<15x15xf32>
    %52 = arith.mulf %51, %50 : vector<15x15xf32>
    %cst_22 = arith.constant dense<0.000000e+00> : vector<15x35xf32>
    %53 = tpu.matmul %48, %47, %cst_22 {dimension_numbers = #tpu.dot_dimension_numbers<[1], [0], [0], [1], [0, 0, 1, 1], [], []>} : vector<15x15xf32>, vector<15x35xf32>, vector<15x35xf32> -> vector<15x35xf32>
    %54 = vector.extract_strided_slice %46 {offsets = [0, 15], sizes = [15, 15], strides = [1, 1]} : vector<15x45xf32> to vector<15x15xf32>
    %55 = tpu.transpose %54, [1, 0] : vector<15x15xf32> -> vector<15x15xf32>
    %56 = arith.addf %54, %55 : vector<15x15xf32>
    %cst_23 = arith.constant 5.000000e-01 : f32
    %57 = vector.broadcast %cst_23 : f32 to vector<15x15xf32>
    %58 = arith.mulf %57, %56 : vector<15x15xf32>
    %cst_24 = arith.constant dense<0.000000e+00> : vector<15x35xf32>
    %59 = tpu.matmul %54, %47, %cst_24 {dimension_numbers = #tpu.dot_dimension_numbers<[1], [0], [0], [1], [0, 0, 1, 1], [], []>} : vector<15x15xf32>, vector<15x35xf32>, vector<15x35xf32> -> vector<15x35xf32>
    %60 = vector.extract_strided_slice %46 {offsets = [0, 30], sizes = [15, 15], strides = [1, 1]} : vector<15x45xf32> to vector<15x15xf32>
    %61 = tpu.transpose %60, [1, 0] : vector<15x15xf32> -> vector<15x15xf32>
    %62 = arith.addf %60, %61 : vector<15x15xf32>
    %cst_25 = arith.constant 5.000000e-01 : f32
    %63 = vector.broadcast %cst_25 : f32 to vector<15x15xf32>
    %64 = arith.mulf %63, %62 : vector<15x15xf32>
    %cst_26 = arith.constant dense<0.000000e+00> : vector<15x35xf32>
    %65 = tpu.matmul %60, %47, %cst_26 {dimension_numbers = #tpu.dot_dimension_numbers<[1], [0], [0], [1], [0, 0, 1, 1], [], []>} : vector<15x15xf32>, vector<15x35xf32>, vector<15x35xf32> -> vector<15x35xf32>
    %66 = tpu.concatenate %52, %58, %64 in 1 : vector<15x15xf32>, vector<15x15xf32>, vector<15x15xf32> -> vector<15x45xf32>
    %67 = tpu.concatenate %45, %66 in 0 : vector<15x45xf32>, vector<15x45xf32> -> vector<30x45xf32>
    %68 = tpu.concatenate %32, %53 in 0 : vector<15x35xf32>, vector<15x35xf32> -> vector<30x35xf32>
    %69 = tpu.concatenate %38, %59 in 0 : vector<15x35xf32>, vector<15x35xf32> -> vector<30x35xf32>
    %70 = tpu.concatenate %44, %65 in 0 : vector<15x35xf32>, vector<15x35xf32> -> vector<30x35xf32>
    %c0_27 = arith.constant 0 : index
    %c0_28 = arith.constant 0 : index
    %71 = vector.load %arg4[%c0_27, %c0_28] : memref<45x120xf32, #tpu.memory_space<vmem>>, vector<45x120xf32>
    %cst_29 = arith.constant dense<0.000000e+00> : vector<30x120xf32>
    %72 = tpu.matmul %67, %71, %cst_29 {dimension_numbers = #tpu.dot_dimension_numbers<[1], [0], [0], [1], [0, 0, 1, 1], [], []>} : vector<30x45xf32>, vector<45x120xf32>, vector<30x120xf32> -> vector<30x120xf32>
    %73 = vector.broadcast %6 : vector<1x120xf32> to vector<30x120xf32>
    %74 = arith.addf %72, %73 : vector<30x120xf32>
    %cst_30 = arith.constant 0.000000e+00 : f32
    %75 = vector.broadcast %cst_30 : f32 to vector<30x120xf32>
    %76 = arith.cmpf ogt, %74, %75 : vector<30x120xf32>
    %cst_31 = arith.constant 0.000000e+00 : f32
    %77 = vector.broadcast %cst_31 : f32 to vector<30x120xf32>
    %78 = arith.minimumf %74, %77 : vector<30x120xf32>
    %79 = math.exp %78 : vector<30x120xf32>
    %cst_32 = arith.constant 1.000000e+00 : f32
    %80 = vector.broadcast %cst_32 : f32 to vector<30x120xf32>
    %81 = arith.subf %79, %80 : vector<30x120xf32>
    %82 = arith.select %76, %74, %81 : vector<30x120xi1>, vector<30x120xf32>
    %c0_33 = arith.constant 0 : index
    %c0_34 = arith.constant 0 : index
    %83 = vector.load %arg5[%c0_33, %c0_34] : memref<120x60xf32, #tpu.memory_space<vmem>>, vector<120x60xf32>
    %cst_35 = arith.constant dense<0.000000e+00> : vector<30x60xf32>
    %84 = tpu.matmul %82, %83, %cst_35 {dimension_numbers = #tpu.dot_dimension_numbers<[1], [0], [0], [1], [0, 0, 1, 1], [], []>} : vector<30x120xf32>, vector<120x60xf32>, vector<30x60xf32> -> vector<30x60xf32>
    %85 = vector.broadcast %7 : vector<1x60xf32> to vector<30x60xf32>
    %86 = arith.addf %84, %85 : vector<30x60xf32>
    %87 = vector.extract_strided_slice %3 {offsets = [0, 0], sizes = [30, 15], strides = [1, 1]} : vector<30x50xf32> to vector<30x15xf32>
    %88 = tpu.concatenate %87, %87, %87, %87 in 1 : vector<30x15xf32>, vector<30x15xf32>, vector<30x15xf32>, vector<30x15xf32> -> vector<30x60xf32>
    %89 = arith.mulf %86, %88 : vector<30x60xf32>
    %90 = math.tanh %89 : vector<30x60xf32>
    %91 = vector.extract_strided_slice %3 {offsets = [0, 15], sizes = [30, 35], strides = [1, 1]} : vector<30x50xf32> to vector<30x35xf32>
    %c24 = arith.constant 24 : index
    %92 = memref.load %arg8[%c24] : memref<41xf32, #tpu.memory_space<smem>>
    %c0_36 = arith.constant 0 : index
    %93 = memref.load %arg8[%c0_36] : memref<41xf32, #tpu.memory_space<smem>>
    %94 = vector.broadcast %93 : f32 to vector<30x35xf32>
    %95 = arith.mulf %68, %94 : vector<30x35xf32>
    %96 = vector.broadcast %92 : f32 to vector<30x35xf32>
    %97 = arith.addf %96, %95 : vector<30x35xf32>
    %c8 = arith.constant 8 : index
    %98 = memref.load %arg8[%c8] : memref<41xf32, #tpu.memory_space<smem>>
    %99 = vector.broadcast %98 : f32 to vector<30x35xf32>
    %100 = arith.mulf %69, %99 : vector<30x35xf32>
    %101 = arith.addf %97, %100 : vector<30x35xf32>
    %c16 = arith.constant 16 : index
    %102 = memref.load %arg8[%c16] : memref<41xf32, #tpu.memory_space<smem>>
    %103 = vector.broadcast %102 : f32 to vector<30x35xf32>
    %104 = arith.mulf %70, %103 : vector<30x35xf32>
    %105 = arith.addf %101, %104 : vector<30x35xf32>
    %cst_37 = arith.constant 0.000000e+00 : f32
    %106 = vector.broadcast %cst_37 : f32 to vector<30x35xf32>
    %107 = arith.cmpf ogt, %105, %106 : vector<30x35xf32>
    %cst_38 = arith.constant 0.000000e+00 : f32
    %108 = vector.broadcast %cst_38 : f32 to vector<30x35xf32>
    %109 = arith.minimumf %105, %108 : vector<30x35xf32>
    %110 = math.exp %109 : vector<30x35xf32>
    %cst_39 = arith.constant 1.000000e+00 : f32
    %111 = vector.broadcast %cst_39 : f32 to vector<30x35xf32>
    %112 = arith.subf %110, %111 : vector<30x35xf32>
    %113 = arith.select %107, %105, %112 : vector<30x35xi1>, vector<30x35xf32>
    %c32 = arith.constant 32 : index
    %114 = memref.load %arg8[%c32] : memref<41xf32, #tpu.memory_space<smem>>
    %115 = vector.broadcast %114 : f32 to vector<30x35xf32>
    %116 = arith.mulf %115, %113 : vector<30x35xf32>
    %c25 = arith.constant 25 : index
    %117 = memref.load %arg8[%c25] : memref<41xf32, #tpu.memory_space<smem>>
    %c1 = arith.constant 1 : index
    %118 = memref.load %arg8[%c1] : memref<41xf32, #tpu.memory_space<smem>>
    %119 = vector.broadcast %118 : f32 to vector<30x35xf32>
    %120 = arith.mulf %68, %119 : vector<30x35xf32>
    %121 = vector.broadcast %117 : f32 to vector<30x35xf32>
    %122 = arith.addf %121, %120 : vector<30x35xf32>
    %c9 = arith.constant 9 : index
    %123 = memref.load %arg8[%c9] : memref<41xf32, #tpu.memory_space<smem>>
    %124 = vector.broadcast %123 : f32 to vector<30x35xf32>
    %125 = arith.mulf %69, %124 : vector<30x35xf32>
    %126 = arith.addf %122, %125 : vector<30x35xf32>
    %c17 = arith.constant 17 : index
    %127 = memref.load %arg8[%c17] : memref<41xf32, #tpu.memory_space<smem>>
    %128 = vector.broadcast %127 : f32 to vector<30x35xf32>
    %129 = arith.mulf %70, %128 : vector<30x35xf32>
    %130 = arith.addf %126, %129 : vector<30x35xf32>
    %cst_40 = arith.constant 0.000000e+00 : f32
    %131 = vector.broadcast %cst_40 : f32 to vector<30x35xf32>
    %132 = arith.cmpf ogt, %130, %131 : vector<30x35xf32>
    %cst_41 = arith.constant 0.000000e+00 : f32
    %133 = vector.broadcast %cst_41 : f32 to vector<30x35xf32>
    %134 = arith.minimumf %130, %133 : vector<30x35xf32>
    %135 = math.exp %134 : vector<30x35xf32>
    %cst_42 = arith.constant 1.000000e+00 : f32
    %136 = vector.broadcast %cst_42 : f32 to vector<30x35xf32>
    %137 = arith.subf %135, %136 : vector<30x35xf32>
    %138 = arith.select %132, %130, %137 : vector<30x35xi1>, vector<30x35xf32>
    %c33 = arith.constant 33 : index
    %139 = memref.load %arg8[%c33] : memref<41xf32, #tpu.memory_space<smem>>
    %140 = vector.broadcast %139 : f32 to vector<30x35xf32>
    %141 = arith.mulf %140, %138 : vector<30x35xf32>
    %142 = arith.addf %116, %141 : vector<30x35xf32>
    %c26 = arith.constant 26 : index
    %143 = memref.load %arg8[%c26] : memref<41xf32, #tpu.memory_space<smem>>
    %c2 = arith.constant 2 : index
    %144 = memref.load %arg8[%c2] : memref<41xf32, #tpu.memory_space<smem>>
    %145 = vector.broadcast %144 : f32 to vector<30x35xf32>
    %146 = arith.mulf %68, %145 : vector<30x35xf32>
    %147 = vector.broadcast %143 : f32 to vector<30x35xf32>
    %148 = arith.addf %147, %146 : vector<30x35xf32>
    %c10 = arith.constant 10 : index
    %149 = memref.load %arg8[%c10] : memref<41xf32, #tpu.memory_space<smem>>
    %150 = vector.broadcast %149 : f32 to vector<30x35xf32>
    %151 = arith.mulf %69, %150 : vector<30x35xf32>
    %152 = arith.addf %148, %151 : vector<30x35xf32>
    %c18 = arith.constant 18 : index
    %153 = memref.load %arg8[%c18] : memref<41xf32, #tpu.memory_space<smem>>
    %154 = vector.broadcast %153 : f32 to vector<30x35xf32>
    %155 = arith.mulf %70, %154 : vector<30x35xf32>
    %156 = arith.addf %152, %155 : vector<30x35xf32>
    %cst_43 = arith.constant 0.000000e+00 : f32
    %157 = vector.broadcast %cst_43 : f32 to vector<30x35xf32>
    %158 = arith.cmpf ogt, %156, %157 : vector<30x35xf32>
    %cst_44 = arith.constant 0.000000e+00 : f32
    %159 = vector.broadcast %cst_44 : f32 to vector<30x35xf32>
    %160 = arith.minimumf %156, %159 : vector<30x35xf32>
    %161 = math.exp %160 : vector<30x35xf32>
    %cst_45 = arith.constant 1.000000e+00 : f32
    %162 = vector.broadcast %cst_45 : f32 to vector<30x35xf32>
    %163 = arith.subf %161, %162 : vector<30x35xf32>
    %164 = arith.select %158, %156, %163 : vector<30x35xi1>, vector<30x35xf32>
    %c34 = arith.constant 34 : index
    %165 = memref.load %arg8[%c34] : memref<41xf32, #tpu.memory_space<smem>>
    %166 = vector.broadcast %165 : f32 to vector<30x35xf32>
    %167 = arith.mulf %166, %164 : vector<30x35xf32>
    %168 = arith.addf %142, %167 : vector<30x35xf32>
    %c27 = arith.constant 27 : index
    %169 = memref.load %arg8[%c27] : memref<41xf32, #tpu.memory_space<smem>>
    %c3 = arith.constant 3 : index
    %170 = memref.load %arg8[%c3] : memref<41xf32, #tpu.memory_space<smem>>
    %171 = vector.broadcast %170 : f32 to vector<30x35xf32>
    %172 = arith.mulf %68, %171 : vector<30x35xf32>
    %173 = vector.broadcast %169 : f32 to vector<30x35xf32>
    %174 = arith.addf %173, %172 : vector<30x35xf32>
    %c11 = arith.constant 11 : index
    %175 = memref.load %arg8[%c11] : memref<41xf32, #tpu.memory_space<smem>>
    %176 = vector.broadcast %175 : f32 to vector<30x35xf32>
    %177 = arith.mulf %69, %176 : vector<30x35xf32>
    %178 = arith.addf %174, %177 : vector<30x35xf32>
    %c19 = arith.constant 19 : index
    %179 = memref.load %arg8[%c19] : memref<41xf32, #tpu.memory_space<smem>>
    %180 = vector.broadcast %179 : f32 to vector<30x35xf32>
    %181 = arith.mulf %70, %180 : vector<30x35xf32>
    %182 = arith.addf %178, %181 : vector<30x35xf32>
    %cst_46 = arith.constant 0.000000e+00 : f32
    %183 = vector.broadcast %cst_46 : f32 to vector<30x35xf32>
    %184 = arith.cmpf ogt, %182, %183 : vector<30x35xf32>
    %cst_47 = arith.constant 0.000000e+00 : f32
    %185 = vector.broadcast %cst_47 : f32 to vector<30x35xf32>
    %186 = arith.minimumf %182, %185 : vector<30x35xf32>
    %187 = math.exp %186 : vector<30x35xf32>
    %cst_48 = arith.constant 1.000000e+00 : f32
    %188 = vector.broadcast %cst_48 : f32 to vector<30x35xf32>
    %189 = arith.subf %187, %188 : vector<30x35xf32>
    %190 = arith.select %184, %182, %189 : vector<30x35xi1>, vector<30x35xf32>
    %c35 = arith.constant 35 : index
    %191 = memref.load %arg8[%c35] : memref<41xf32, #tpu.memory_space<smem>>
    %192 = vector.broadcast %191 : f32 to vector<30x35xf32>
    %193 = arith.mulf %192, %190 : vector<30x35xf32>
    %194 = arith.addf %168, %193 : vector<30x35xf32>
    %c28 = arith.constant 28 : index
    %195 = memref.load %arg8[%c28] : memref<41xf32, #tpu.memory_space<smem>>
    %c4 = arith.constant 4 : index
    %196 = memref.load %arg8[%c4] : memref<41xf32, #tpu.memory_space<smem>>
    %197 = vector.broadcast %196 : f32 to vector<30x35xf32>
    %198 = arith.mulf %68, %197 : vector<30x35xf32>
    %199 = vector.broadcast %195 : f32 to vector<30x35xf32>
    %200 = arith.addf %199, %198 : vector<30x35xf32>
    %c12 = arith.constant 12 : index
    %201 = memref.load %arg8[%c12] : memref<41xf32, #tpu.memory_space<smem>>
    %202 = vector.broadcast %201 : f32 to vector<30x35xf32>
    %203 = arith.mulf %69, %202 : vector<30x35xf32>
    %204 = arith.addf %200, %203 : vector<30x35xf32>
    %c20 = arith.constant 20 : index
    %205 = memref.load %arg8[%c20] : memref<41xf32, #tpu.memory_space<smem>>
    %206 = vector.broadcast %205 : f32 to vector<30x35xf32>
    %207 = arith.mulf %70, %206 : vector<30x35xf32>
    %208 = arith.addf %204, %207 : vector<30x35xf32>
    %cst_49 = arith.constant 0.000000e+00 : f32
    %209 = vector.broadcast %cst_49 : f32 to vector<30x35xf32>
    %210 = arith.cmpf ogt, %208, %209 : vector<30x35xf32>
    %cst_50 = arith.constant 0.000000e+00 : f32
    %211 = vector.broadcast %cst_50 : f32 to vector<30x35xf32>
    %212 = arith.minimumf %208, %211 : vector<30x35xf32>
    %213 = math.exp %212 : vector<30x35xf32>
    %cst_51 = arith.constant 1.000000e+00 : f32
    %214 = vector.broadcast %cst_51 : f32 to vector<30x35xf32>
    %215 = arith.subf %213, %214 : vector<30x35xf32>
    %216 = arith.select %210, %208, %215 : vector<30x35xi1>, vector<30x35xf32>
    %c36 = arith.constant 36 : index
    %217 = memref.load %arg8[%c36] : memref<41xf32, #tpu.memory_space<smem>>
    %218 = vector.broadcast %217 : f32 to vector<30x35xf32>
    %219 = arith.mulf %218, %216 : vector<30x35xf32>
    %220 = arith.addf %194, %219 : vector<30x35xf32>
    %c29 = arith.constant 29 : index
    %221 = memref.load %arg8[%c29] : memref<41xf32, #tpu.memory_space<smem>>
    %c5 = arith.constant 5 : index
    %222 = memref.load %arg8[%c5] : memref<41xf32, #tpu.memory_space<smem>>
    %223 = vector.broadcast %222 : f32 to vector<30x35xf32>
    %224 = arith.mulf %68, %223 : vector<30x35xf32>
    %225 = vector.broadcast %221 : f32 to vector<30x35xf32>
    %226 = arith.addf %225, %224 : vector<30x35xf32>
    %c13 = arith.constant 13 : index
    %227 = memref.load %arg8[%c13] : memref<41xf32, #tpu.memory_space<smem>>
    %228 = vector.broadcast %227 : f32 to vector<30x35xf32>
    %229 = arith.mulf %69, %228 : vector<30x35xf32>
    %230 = arith.addf %226, %229 : vector<30x35xf32>
    %c21 = arith.constant 21 : index
    %231 = memref.load %arg8[%c21] : memref<41xf32, #tpu.memory_space<smem>>
    %232 = vector.broadcast %231 : f32 to vector<30x35xf32>
    %233 = arith.mulf %70, %232 : vector<30x35xf32>
    %234 = arith.addf %230, %233 : vector<30x35xf32>
    %cst_52 = arith.constant 0.000000e+00 : f32
    %235 = vector.broadcast %cst_52 : f32 to vector<30x35xf32>
    %236 = arith.cmpf ogt, %234, %235 : vector<30x35xf32>
    %cst_53 = arith.constant 0.000000e+00 : f32
    %237 = vector.broadcast %cst_53 : f32 to vector<30x35xf32>
    %238 = arith.minimumf %234, %237 : vector<30x35xf32>
    %239 = math.exp %238 : vector<30x35xf32>
    %cst_54 = arith.constant 1.000000e+00 : f32
    %240 = vector.broadcast %cst_54 : f32 to vector<30x35xf32>
    %241 = arith.subf %239, %240 : vector<30x35xf32>
    %242 = arith.select %236, %234, %241 : vector<30x35xi1>, vector<30x35xf32>
    %c37 = arith.constant 37 : index
    %243 = memref.load %arg8[%c37] : memref<41xf32, #tpu.memory_space<smem>>
    %244 = vector.broadcast %243 : f32 to vector<30x35xf32>
    %245 = arith.mulf %244, %242 : vector<30x35xf32>
    %246 = arith.addf %220, %245 : vector<30x35xf32>
    %c30 = arith.constant 30 : index
    %247 = memref.load %arg8[%c30] : memref<41xf32, #tpu.memory_space<smem>>
    %c6 = arith.constant 6 : index
    %248 = memref.load %arg8[%c6] : memref<41xf32, #tpu.memory_space<smem>>
    %249 = vector.broadcast %248 : f32 to vector<30x35xf32>
    %250 = arith.mulf %68, %249 : vector<30x35xf32>
    %251 = vector.broadcast %247 : f32 to vector<30x35xf32>
    %252 = arith.addf %251, %250 : vector<30x35xf32>
    %c14 = arith.constant 14 : index
    %253 = memref.load %arg8[%c14] : memref<41xf32, #tpu.memory_space<smem>>
    %254 = vector.broadcast %253 : f32 to vector<30x35xf32>
    %255 = arith.mulf %69, %254 : vector<30x35xf32>
    %256 = arith.addf %252, %255 : vector<30x35xf32>
    %c22 = arith.constant 22 : index
    %257 = memref.load %arg8[%c22] : memref<41xf32, #tpu.memory_space<smem>>
    %258 = vector.broadcast %257 : f32 to vector<30x35xf32>
    %259 = arith.mulf %70, %258 : vector<30x35xf32>
    %260 = arith.addf %256, %259 : vector<30x35xf32>
    %cst_55 = arith.constant 0.000000e+00 : f32
    %261 = vector.broadcast %cst_55 : f32 to vector<30x35xf32>
    %262 = arith.cmpf ogt, %260, %261 : vector<30x35xf32>
    %cst_56 = arith.constant 0.000000e+00 : f32
    %263 = vector.broadcast %cst_56 : f32 to vector<30x35xf32>
    %264 = arith.minimumf %260, %263 : vector<30x35xf32>
    %265 = math.exp %264 : vector<30x35xf32>
    %cst_57 = arith.constant 1.000000e+00 : f32
    %266 = vector.broadcast %cst_57 : f32 to vector<30x35xf32>
    %267 = arith.subf %265, %266 : vector<30x35xf32>
    %268 = arith.select %262, %260, %267 : vector<30x35xi1>, vector<30x35xf32>
    %c38 = arith.constant 38 : index
    %269 = memref.load %arg8[%c38] : memref<41xf32, #tpu.memory_space<smem>>
    %270 = vector.broadcast %269 : f32 to vector<30x35xf32>
    %271 = arith.mulf %270, %268 : vector<30x35xf32>
    %272 = arith.addf %246, %271 : vector<30x35xf32>
    %c31 = arith.constant 31 : index
    %273 = memref.load %arg8[%c31] : memref<41xf32, #tpu.memory_space<smem>>
    %c7 = arith.constant 7 : index
    %274 = memref.load %arg8[%c7] : memref<41xf32, #tpu.memory_space<smem>>
    %275 = vector.broadcast %274 : f32 to vector<30x35xf32>
    %276 = arith.mulf %68, %275 : vector<30x35xf32>
    %277 = vector.broadcast %273 : f32 to vector<30x35xf32>
    %278 = arith.addf %277, %276 : vector<30x35xf32>
    %c15 = arith.constant 15 : index
    %279 = memref.load %arg8[%c15] : memref<41xf32, #tpu.memory_space<smem>>
    %280 = vector.broadcast %279 : f32 to vector<30x35xf32>
    %281 = arith.mulf %69, %280 : vector<30x35xf32>
    %282 = arith.addf %278, %281 : vector<30x35xf32>
    %c23 = arith.constant 23 : index
    %283 = memref.load %arg8[%c23] : memref<41xf32, #tpu.memory_space<smem>>
    %284 = vector.broadcast %283 : f32 to vector<30x35xf32>
    %285 = arith.mulf %70, %284 : vector<30x35xf32>
    %286 = arith.addf %282, %285 : vector<30x35xf32>
    %cst_58 = arith.constant 0.000000e+00 : f32
    %287 = vector.broadcast %cst_58 : f32 to vector<30x35xf32>
    %288 = arith.cmpf ogt, %286, %287 : vector<30x35xf32>
    %cst_59 = arith.constant 0.000000e+00 : f32
    %289 = vector.broadcast %cst_59 : f32 to vector<30x35xf32>
    %290 = arith.minimumf %286, %289 : vector<30x35xf32>
    %291 = math.exp %290 : vector<30x35xf32>
    %cst_60 = arith.constant 1.000000e+00 : f32
    %292 = vector.broadcast %cst_60 : f32 to vector<30x35xf32>
    %293 = arith.subf %291, %292 : vector<30x35xf32>
    %294 = arith.select %288, %286, %293 : vector<30x35xi1>, vector<30x35xf32>
    %c39 = arith.constant 39 : index
    %295 = memref.load %arg8[%c39] : memref<41xf32, #tpu.memory_space<smem>>
    %296 = vector.broadcast %295 : f32 to vector<30x35xf32>
    %297 = arith.mulf %296, %294 : vector<30x35xf32>
    %298 = arith.addf %272, %297 : vector<30x35xf32>
    %c40 = arith.constant 40 : index
    %299 = memref.load %arg8[%c40] : memref<41xf32, #tpu.memory_space<smem>>
    %300 = vector.broadcast %299 : f32 to vector<30x35xf32>
    %301 = arith.addf %298, %300 : vector<30x35xf32>
    %302 = arith.mulf %301, %91 : vector<30x35xf32>
    %cst_61 = arith.constant 0.000000e+00 : f32
    %303 = vector.broadcast %cst_61 : f32 to vector<30x33xf32>
    %304 = tpu.concatenate %90, %302, %303 in 1 : vector<30x60xf32>, vector<30x35xf32>, vector<30x33xf32> -> vector<30x128xf32>
    %c0_62 = arith.constant 0 : index
    %c0_63 = arith.constant 0 : index
    %305 = vector.load %arg9[%c0_62, %c0_63] : memref<30x128xf32, #tpu.memory_space<vmem>>, vector<30x128xf32>
    tpu.vector_store %arg9[%c0_62, %c0_63], %304 {strides = array<i32>} : memref<30x128xf32, #tpu.memory_space<vmem>>, vector<30x128xf32>,
    return
  }
}

</mosaic_0001>

<llo_original>
// kernel: hodge_baseline_layer.1
$region0: #{hodge_baseline_layer.1}
  #allocation0 [shape = 'u32[]', space=smem, size = 0x4, offset = 0x4, fixed_abs, tag = 'smem constant byte address 0x4 - core index']
  #allocation1 [shape = 'u32[144,128]{1,0:T(1,128)}', space=vmem, size = 0x12000, scoped, tag = 'internal scratch']
  %s0 = inlined_call_operand.vmem [shape: f32[30,45], index: 0, kind: input, shape index: {}]
  %s1 = inlined_call_operand.vmem [shape: f32[30,35], index: 1, kind: input, shape index: {}]
  %s2 = inlined_call_operand.vmem [shape: f32[45,24], index: 2, kind: input, shape index: {}]
  %s3 = inlined_call_operand.vmem [shape: f32[24,45], index: 3, kind: input, shape index: {}]
  %s4 = inlined_call_operand.vmem [shape: f32[45,120], index: 4, kind: input, shape index: {}]
  %s5 = inlined_call_operand.vmem [shape: f32[120,60], index: 5, kind: input, shape index: {}]
  %s6 = inlined_call_operand.vmem [shape: f32[4,120], index: 6, kind: input, shape index: {}]
  %s7 = inlined_call_operand.vmem [shape: f32[30,50], index: 7, kind: input, shape index: {}]
  %s8 = inlined_call_operand.vmem [shape: f32[41], index: 8, kind: input, shape index: {}]
  %s9 = inlined_call_operand.vmem [shape: f32[30,128], index: 9, kind: output, shape index: {}]
  %s10 = sld [smem:[#allocation0]]
  $region50: #{hodge_baseline_layer.1} parent=0
    _
  %s12 = ssub.s32 1, %s10
  %s13 = scalar_select 0, %s12, %s10
  $region1: #{hodge_baseline_layer.1} parent=0
    #allocation2 [shape = 'u8[512]{0}', space=smem, size = 0x200, scoped, tag = 'input window, operand 8, single buffered']
    #allocation3 [shape = 's32[1]{0}', space=sflag, size = 0x4, scoped, tag = 'scoped memory for hodge_baseline_layer.1']
    %14 = vsyncpa [#allocation3], 0
    // Predicated region
    $region2: #{hodge_baseline_layer.1} parent=1 // pred_check
      _
    $region3: #{hodge_baseline_layer.1} parent=1 // pred_check_branch
      %16 = sbr.rel (0) target = $region5
    $region4: #{hodge_baseline_layer.1} parent=1 // pred_region
      _
    $region5: #{hodge_baseline_layer.1} parent=1 // pred_fallthru
      _
    // Predicated region
    $region6: #{hodge_baseline_layer.1} parent=1 // pred_check
      _
    $region7: #{hodge_baseline_layer.1} parent=1 // pred_check_branch
      %18 = sbr.rel (0) target = $region9
    $region8: #{hodge_baseline_layer.1} parent=1 // pred_region
      _
    $region9: #{hodge_baseline_layer.1} parent=1 // pred_fallthru
      _
    // Predicated region
    $region10: #{hodge_baseline_layer.1} parent=1 // pred_check
      _
    $region11: #{hodge_baseline_layer.1} parent=1 // pred_check_branch
      %20 = sbr.rel (0) target = $region13
    $region12: #{hodge_baseline_layer.1} parent=1 // pred_region
      _
    $region13: #{hodge_baseline_layer.1} parent=1 // pred_fallthru
      _
    // Predicated region
    $region14: #{hodge_baseline_layer.1} parent=1 // pred_check
      _
    $region15: #{hodge_baseline_layer.1} parent=1 // pred_check_branch
      %22 = sbr.rel (0) target = $region17
    $region16: #{hodge_baseline_layer.1} parent=1 // pred_region
      _
    $region17: #{hodge_baseline_layer.1} parent=1 // pred_fallthru
      _
    // Predicated region
    $region18: #{hodge_baseline_layer.1} parent=1 // pred_check
      _
    $region19: #{hodge_baseline_layer.1} parent=1 // pred_check_branch
      %24 = sbr.rel (0) target = $region21
    $region20: #{hodge_baseline_layer.1} parent=1 // pred_region
      _
    $region21: #{hodge_baseline_layer.1} parent=1 // pred_fallthru
      _
    // Predicated region
    $region22: #{hodge_baseline_layer.1} parent=1 // pred_check
      _
    $region23: #{hodge_baseline_layer.1} parent=1 // pred_check_branch
      %26 = sbr.rel (0) target = $region25
    $region24: #{hodge_baseline_layer.1} parent=1 // pred_region
      _
    $region25: #{hodge_baseline_layer.1} parent=1 // pred_fallthru
      _
    // Predicated region
    $region26: #{hodge_baseline_layer.1} parent=1 // pred_check
      _
    $region27: #{hodge_baseline_layer.1} parent=1 // pred_check_branch
      %28 = sbr.rel (0) target = $region29
    $region28: #{hodge_baseline_layer.1} parent=1 // pred_region
      _
    $region29: #{hodge_baseline_layer.1} parent=1 // pred_fallthru
      _
    // Predicated region
    $region30: #{hodge_baseline_layer.1} parent=1 // pred_check
      _
    $region31: #{hodge_baseline_layer.1} parent=1 // pred_check_branch
      %30 = sbr.rel (0) target = $region33
    $region32: #{hodge_baseline_layer.1} parent=1 // pred_region
      _
    $region33: #{hodge_baseline_layer.1} parent=1 // pred_fallthru
      _
    // Predicated region
    $region34: #{hodge_baseline_layer.1} parent=1 // pred_check
      _
    $region35: #{hodge_baseline_layer.1} parent=1 // pred_check_branch
      %32 = sbr.rel (0) target = $region37
    $region36: #{hodge_baseline_layer.1} parent=1 // pred_region
      %s34 = ssub.s32 16, 16
      %35 = vsyncadd [#allocation3], %s34
      %s37 = sshll.u32 %s8, 4
      %s38 = int_to_ptr.vmem [resolvable:$true] %s37
      %40 = dma.vmem_to_smem %s38, 16, [#allocation2], [#allocation3]
    $region37: #{hodge_baseline_layer.1} parent=1 // pred_fallthru
      _
    // Predicated region
    $region38: #{hodge_baseline_layer.1} parent=1 // pred_check
      _
    $region39: #{hodge_baseline_layer.1} parent=1 // pred_check_branch
      %42 = sbr.rel (0) target = $region41
    $region40: #{hodge_baseline_layer.1} parent=1 // pred_region
      %43 = dma.done [#allocation3], 16
    $region41: #{hodge_baseline_layer.1} parent=1 // pred_fallthru
      _
    %44 = sfence
    %v45 = vld [vmem:[%s0] sm:$0xff]
    %v46 = vld [vmem:[%s0 + $0x8] sm:$0xff]
    %v47 = vld [vmem:[%s0 + $0x10] sm:$0xff]
    %v48 = vld [vmem:[%s0 + $0x18] sm:$0x3f]
    %v49 = vld [vmem:[%s1] sm:$0xff]
    %v50 = vld [vmem:[%s1 + $0x8] sm:$0xff]
    %v51 = vld [vmem:[%s1 + $0x10] sm:$0xff]
    %v52 = vld [vmem:[%s1 + $0x18] sm:$0x3f]
    %v53 = vld [vmem:[%s6] sm:$0xf]
    %v54 = vld [vmem:[%s7] sm:$0xff]
    %v55 = vld [vmem:[%s7 + $0x8] sm:$0xff]
    %v56 = vld [vmem:[%s7 + $0x10] sm:$0xff]
    %v57 = vld [vmem:[%s7 + $0x18] sm:$0x3f]
    %v58 = vld [vmem:[%s2] sm:$0xff]
    %v59 = vld [vmem:[%s2 + $0x8] sm:$0xff]
    %v60 = vld [vmem:[%s2 + $0x10] sm:$0xff]
    %v61 = vld [vmem:[%s2 + $0x18] sm:$0xff]
    %v62 = vld [vmem:[%s2 + $0x20] sm:$0xff]
    %v63 = vld [vmem:[%s2 + $0x28] sm:$0x1f]
    %v64 = vlaneseq
    %v65 = vshrl.u32 %v64, 7
    %v66 = vsub.s32 0, %v65
    %v67 = vrot.slane %v53, %v66
    %vm68 = vcmask 367616
    %v70 = vsel %vm68, %v45, 0
    %v73 = vsel %vm68, %v46, 0
    %v76 = vsel %vm68, %v47, 0
    %v79 = vsel %vm68, %v48, 0
    %vm81 = vcmask 1044480
    %v83 = vsel %vm81, %v63, 0
    %85 = vmatprep.subr.mxu0 0.0
    %86 = vmatpush1.msra.mxu0 0.0
    %87 = vmatprep.subr.mxu0 0.0
    %88 = vmatpush1.msra.mxu0 0.0
    %89 = vmatprep.subr.mxu0 0.0
    %90 = vmatpush1.msra.mxu0 0.0
    %91 = vmatprep.subr.mxu0 0.0
    %92 = vmatpush1.msra.mxu0 0.0
    %93 = vmatprep.subr.mxu0 0.0
    %94 = vmatpush1.msra.mxu0 0.0
    %95 = vmatprep.subr.mxu0 0.0
    %96 = vmatpush1.msra.mxu0 0.0
    %97 = vmatprep.subr.mxu0 0.0
    %98 = vmatpush1.msra.mxu0 0.0
    %99 = vmatprep.subr.mxu0 0.0
    %100 = vmatpush1.msra.mxu0 0.0
    %101 = vmatprep.subr.mxu0 0.0
    %102 = vmatpush1.msra.mxu0 0.0
    %103 = vmatprep.subr.mxu0 0.0
    %104 = vmatpush1.msra.mxu0 0.0
    %105 = vmatprep.subr.mxu0 0.0
    %106 = vmatpush1.msra.mxu0 %v83
    %107 = vmatprep.subr.mxu0 0.0
    %108 = vmatpush1.msra.mxu0 %v62
    %109 = vmatprep.subr.mxu0 0.0
    %110 = vmatpush1.msra.mxu0 %v61
    %111 = vmatprep.subr.mxu0 0.0
    %112 = vmatpush1.msra.mxu0 %v60
    %113 = vmatprep.subr.mxu0 0.0
    %114 = vmatpush1.msra.mxu0 %v59
    %115 = vmatprep.subr.mxu0 0.0
    %116 = vmatpush1.msra.mxu0 %v58
    %117 = vmatprep.subr.mxu0 0.0
    %118 = vmatpush2.msra.mxu0 0.0
    %119 = vmatprep.subr.mxu0 0.0
    %120 = vmatpush2.msra.mxu0 0.0
    %121 = vmatprep.subr.mxu0 0.0
    %122 = vmatpush2.msra.mxu0 0.0
    %123 = vmatprep.subr.mxu0 0.0
    %124 = vmatpush2.msra.mxu0 0.0
    %125 = vmatprep.subr.mxu0 0.0
    %126 = vmatpush2.msra.mxu0 0.0
    %127 = vmatprep.subr.mxu0 0.0
    %128 = vmatpush2.msra.mxu0 0.0
    %129 = vmatprep.subr.mxu0 0.0
    %130 = vmatpush2.msra.mxu0 0.0
    %131 = vmatprep.subr.mxu0 0.0
    %132 = vmatpush2.msra.mxu0 0.0
    %133 = vmatprep.subr.mxu0 0.0
    %134 = vmatpush2.msra.mxu0 0.0
    %135 = vmatprep.subr.mxu0 0.0
    %136 = vmatpush2.msra.mxu0 0.0
    %137 = vmatprep.subr.mxu0 0.0
    %138 = vmatpush2.msra.mxu0 0.0
    %139 = vmatprep.subr.mxu0 0.0
    %140 = vmatpush2.msra.mxu0 0.0
    %141 = vmatprep.subr.mxu0 0.0
    %142 = vmatpush2.msra.mxu0 0.0
    %143 = vmatprep.subr.mxu0 0.0
    %144 = vmatpush2.msra.mxu0 0.0
    %145 = vmatprep.subr.mxu0 0.0
    %146 = vmatpush2.msra.mxu0 0.0
    %147 = vmatprep.subr.mxu0 0.0
    %148 = vmatpush2.msra.mxu0 0.0
    %149 = vmatprep.mubr.f32.mxu0 0.0
    %150 = vmatmul.mubr.f32.gmra.mxu0 %v70
    %v151 = vpop.f32.mrf.mxu0
    %v152 = vadd.f32 %v67, %v151
    %v153 = vpop.f32.mrf.mxu0
    %154 = vmatprep.mubr.f32.mxu0 0.0
    %155 = vmatmul.mubr.f32.gmra.mxu0 %v73
    %v156 = vpop.f32.mrf.mxu0
    %v157 = vadd.f32 %v67, %v156
    %v158 = vpop.f32.mrf.mxu0
    %159 = vmatprep.mubr.f32.mxu0 0.0
    %160 = vmatmul.mubr.f32.gmra.mxu0 %v76
    %v161 = vpop.f32.mrf.mxu0
    %v162 = vadd.f32 %v67, %v161
    %v163 = vpop.f32.mrf.mxu0
    %164 = vmatprep.mubr.f32.mxu0 0.0
    %165 = vmatmul.mubr.f32.gmra.mxu0 %v79
    %v166 = vpop.f32.mrf.mxu0
    %v167 = vadd.f32 %v67, %v166
    %v168 = vpop.f32.mrf.mxu0
    %169 = vdwg.mxu0
    %vm170 = vcmp.gt.f32.partialorder %v152, 0.0
    %vm171 = vcmp.gt.f32.partialorder %v157, 0.0
    %vm172 = vcmp.gt.f32.partialorder %v162, 0.0
    %vm173 = vcmp.gt.f32.partialorder %v167, 0.0
    %v174 = vmin.f32 %v152, 0.0
    %v175 = vmin.f32 %v157, 0.0
    %v176 = vmin.f32 %v162, 0.0
    %v177 = vmin.f32 %v167, 0.0
    %v178 = vmul.f32 %v174, 1.442695
    %v179 = vpow.pop %v178
    %v180 = vmul.f32 %v175, 1.442695
    %v181 = vpow.pop %v180
    %v182 = vmul.f32 %v176, 1.442695
    %v183 = vpow.pop %v182
    %v184 = vmul.f32 %v177, 1.442695
    %v185 = vpow.pop %v184
    %v186 = vsub.f32 %v179, 1.0
    %v187 = vsub.f32 %v181, 1.0
    %v188 = vsub.f32 %v183, 1.0
    %v189 = vsub.f32 %v185, 1.0
    %v190 = vsel %vm170, %v152, %v186
    %v191 = vsel %vm171, %v157, %v187
    %v192 = vsel %vm172, %v162, %v188
    %v193 = vsel %vm173, %v167, %v189
    %v194 = vld [vmem:[%s3] sm:$0xff]
    %v195 = vld [vmem:[%s3 + $0x8] sm:$0xff]
    %v196 = vld [vmem:[%s3 + $0x10] sm:$0xff]
    %v197 = vlaneseq
    %v198 = vshrl.u32 %v197, 7
    %v199 = vsub.s32 1, %v198
    %v200 = vrot.slane %v53, %v199
    %vm201 = vcmask 195584
    %v203 = vsel %vm201, %v190, 0
    %v206 = vsel %vm201, %v191, 0
    %v209 = vsel %vm201, %v192, 0
    %v212 = vsel %vm201, %v193, 0
    %214 = vmatprep.subr.mxu0 0.0
    %215 = vmatpush1.msra.mxu0 0.0
    %216 = vmatprep.subr.mxu0 0.0
    %217 = vmatpush1.msra.mxu0 0.0
    %218 = vmatprep.subr.mxu0 0.0
    %219 = vmatpush1.msra.mxu0 0.0
    %220 = vmatprep.subr.mxu0 0.0
    %221 = vmatpush1.msra.mxu0 0.0
    %222 = vmatprep.subr.mxu0 0.0
    %223 = vmatpush1.msra.mxu0 0.0
    %224 = vmatprep.subr.mxu0 0.0
    %225 = vmatpush1.msra.mxu0 0.0
    %226 = vmatprep.subr.mxu0 0.0
    %227 = vmatpush1.msra.mxu0 0.0
    %228 = vmatprep.subr.mxu0 0.0
    %229 = vmatpush1.msra.mxu0 0.0
    %230 = vmatprep.subr.mxu0 0.0
    %231 = vmatpush1.msra.mxu0 0.0
    %232 = vmatprep.subr.mxu0 0.0
    %233 = vmatpush1.msra.mxu0 0.0
    %234 = vmatprep.subr.mxu0 0.0
    %235 = vmatpush1.msra.mxu0 0.0
    %236 = vmatprep.subr.mxu0 0.0
    %237 = vmatpush1.msra.mxu0 0.0
    %238 = vmatprep.subr.mxu0 0.0
    %239 = vmatpush1.msra.mxu0 0.0
    %240 = vmatprep.subr.mxu0 0.0
    %241 = vmatpush1.msra.mxu0 %v196
    %242 = vmatprep.subr.mxu0 0.0
    %243 = vmatpush1.msra.mxu0 %v195
    %244 = vmatprep.subr.mxu0 0.0
    %245 = vmatpush1.msra.mxu0 %v194
    %246 = vmatprep.subr.mxu0 0.0
    %247 = vmatpush2.msra.mxu0 0.0
    %248 = vmatprep.subr.mxu0 0.0
    %249 = vmatpush2.msra.mxu0 0.0
    %250 = vmatprep.subr.mxu0 0.0
    %251 = vmatpush2.msra.mxu0 0.0
    %252 = vmatprep.subr.mxu0 0.0
    %253 = vmatpush2.msra.mxu0 0.0
    %254 = vmatprep.subr.mxu0 0.0
    %255 = vmatpush2.msra.mxu0 0.0
    %256 = vmatprep.subr.mxu0 0.0
    %257 = vmatpush2.msra.mxu0 0.0
    %258 = vmatprep.subr.mxu0 0.0
    %259 = vmatpush2.msra.mxu0 0.0
    %260 = vmatprep.subr.mxu0 0.0
    %261 = vmatpush2.msra.mxu0 0.0
    %262 = vmatprep.subr.mxu0 0.0
    %263 = vmatpush2.msra.mxu0 0.0
    %264 = vmatprep.subr.mxu0 0.0
    %265 = vmatpush2.msra.mxu0 0.0
    %266 = vmatprep.subr.mxu0 0.0
    %267 = vmatpush2.msra.mxu0 0.0
    %268 = vmatprep.subr.mxu0 0.0
    %269 = vmatpush2.msra.mxu0 0.0
    %270 = vmatprep.subr.mxu0 0.0
    %271 = vmatpush2.msra.mxu0 0.0
    %272 = vmatprep.subr.mxu0 0.0
    %273 = vmatpush2.msra.mxu0 0.0
    %274 = vmatprep.subr.mxu0 0.0
    %275 = vmatpush2.msra.mxu0 0.0
    %276 = vmatprep.subr.mxu0 0.0
    %277 = vmatpush2.msra.mxu0 0.0
    %278 = vmatprep.mubr.f32.mxu0 0.0
    %279 = vmatmul.mubr.f32.gmra.mxu0 %v203
    %v280 = vpop.f32.mrf.mxu0
    %v281 = vadd.f32 %v200, %v280
    %v282 = vpop.f32.mrf.mxu0
    %283 = vmatprep.mubr.f32.mxu0 0.0
    %284 = vmatmul.mubr.f32.gmra.mxu0 %v206
    %v285 = vpop.f32.mrf.mxu0
    %v286 = vadd.f32 %v200, %v285
    %v287 = vpop.f32.mrf.mxu0
    %288 = vmatprep.mubr.f32.mxu0 0.0
    %289 = vmatmul.mubr.f32.gmra.mxu0 %v209
    %v290 = vpop.f32.mrf.mxu0
    %v291 = vadd.f32 %v200, %v290
    %v292 = vpop.f32.mrf.mxu0
    %293 = vmatprep.mubr.f32.mxu0 0.0
    %294 = vmatmul.mubr.f32.gmra.mxu0 %v212
    %v295 = vpop.f32.mrf.mxu0
    %v296 = vadd.f32 %v200, %v295
    %v297 = vpop.f32.mrf.mxu0
    %298 = vdwg.mxu0
    %v299 = vtanh.pop %v281
    %v300 = vtanh.pop %v286
    %v301 = vtanh.pop %v291
    %v302 = vtanh.pop %v296
    %303 = vxpose.xlu0.b32.start [1/16] %v299, 128
    %304 = vxpose.xlu0.b32.cont [2/16] %v300, 128
    %305 = vxpose.xlu0.b32.cont [3/16] 0.0, 128
    %306 = vxpose.xlu0.b32.cont [4/16] 0.0, 128
    %307 = vxpose.xlu0.b32.cont [5/16] 0.0, 128
    %308 = vxpose.xlu0.b32.cont [6/16] 0.0, 128
    %309 = vxpose.xlu0.b32.cont [7/16] 0.0, 128
    %310 = vxpose.xlu0.b32.cont [8/16] 0.0, 128
    %311 = vxpose.xlu0.b32.cont [9/16] 0.0, 128
    %312 = vxpose.xlu0.b32.cont [10/16] 0.0, 128
    %313 = vxpose.xlu0.b32.cont [11/16] 0.0, 128
    %314 = vxpose.xlu0.b32.cont [12/16] 0.0, 128
    %315 = vxpose.xlu0.b32.cont [13/16] 0.0, 128
    %316 = vxpose.xlu0.b32.cont [14/16] 0.0, 128
    %317 = vxpose.xlu0.b32.cont [15/16] 0.0, 128
    %318 = vxpose.xlu0.b32.end [16/16] 0.0, 128
    %v319 = vpop.trf.xlu0
    %v320 = vpop.trf.xlu0
    %v321 = vpop.trf.xlu0
    %v322 = vpop.trf.xlu0
    %v323 = vpop.trf.xlu0
    %v324 = vpop.trf.xlu0
    %v325 = vpop.trf.xlu0
    %v326 = vpop.trf.xlu0
    %v327 = vpop.trf.xlu0
    %v328 = vpop.trf.xlu0
    %v329 = vpop.trf.xlu0
    %v330 = vpop.trf.xlu0
    %v331 = vpop.trf.xlu0
    %v332 = vpop.trf.xlu0
    %v333 = vpop.trf.xlu0
    %v334 = vpop.trf.xlu0
    %v335 = vadd.f32 %v299, %v319
    %v336 = vadd.f32 %v300, %v320
    %v337 = vmul.f32 %v335, 0.5
    %v338 = vmul.f32 %v336, 0.5
    %vm339 = vcmask 121856
    %v341 = vsel %vm339, %v299, 0
    %v344 = vsel %vm339, %v300, 0
    %vm346 = vcmask 1046528
    %v348 = vsel %vm346, %v50, 0
    %350 = vmatprep.subr.mxu0 0.0
    %351 = vmatpush1.msra.mxu0 0.0
    %352 = vmatprep.subr.mxu0 0.0
    %353 = vmatpush1.msra.mxu0 0.0
    %354 = vmatprep.subr.mxu0 0.0
    %355 = vmatpush1.msra.mxu0 0.0
    %356 = vmatprep.subr.mxu0 0.0
    %357 = vmatpush1.msra.mxu0 0.0
    %358 = vmatprep.subr.mxu0 0.0
    %359 = vmatpush1.msra.mxu0 0.0
    %360 = vmatprep.subr.mxu0 0.0
    %361 = vmatpush1.msra.mxu0 0.0
    %362 = vmatprep.subr.mxu0 0.0
    %363 = vmatpush1.msra.mxu0 0.0
    %364 = vmatprep.subr.mxu0 0.0
    %365 = vmatpush1.msra.mxu0 0.0
    %366 = vmatprep.subr.mxu0 0.0
    %367 = vmatpush1.msra.mxu0 0.0
    %368 = vmatprep.subr.mxu0 0.0
    %369 = vmatpush1.msra.mxu0 0.0
    %370 = vmatprep.subr.mxu0 0.0
    %371 = vmatpush1.msra.mxu0 0.0
    %372 = vmatprep.subr.mxu0 0.0
    %373 = vmatpush1.msra.mxu0 0.0
    %374 = vmatprep.subr.mxu0 0.0
    %375 = vmatpush1.msra.mxu0 0.0
    %376 = vmatprep.subr.mxu0 0.0
    %377 = vmatpush1.msra.mxu0 0.0
    %378 = vmatprep.subr.mxu0 0.0
    %379 = vmatpush1.msra.mxu0 %v348
    %380 = vmatprep.subr.mxu0 0.0
    %381 = vmatpush1.msra.mxu0 %v49
    %382 = vmatprep.subr.mxu0 0.0
    %383 = vmatpush2.msra.mxu0 0.0
    %384 = vmatprep.subr.mxu0 0.0
    %385 = vmatpush2.msra.mxu0 0.0
    %386 = vmatprep.subr.mxu0 0.0
    %387 = vmatpush2.msra.mxu0 0.0
    %388 = vmatprep.subr.mxu0 0.0
    %389 = vmatpush2.msra.mxu0 0.0
    %390 = vmatprep.subr.mxu0 0.0
    %391 = vmatpush2.msra.mxu0 0.0
    %392 = vmatprep.subr.mxu0 0.0
    %393 = vmatpush2.msra.mxu0 0.0
    %394 = vmatprep.subr.mxu0 0.0
    %395 = vmatpush2.msra.mxu0 0.0
    %396 = vmatprep.subr.mxu0 0.0
    %397 = vmatpush2.msra.mxu0 0.0
    %398 = vmatprep.subr.mxu0 0.0
    %399 = vmatpush2.msra.mxu0 0.0
    %400 = vmatprep.subr.mxu0 0.0
    %401 = vmatpush2.msra.mxu0 0.0
    %402 = vmatprep.subr.mxu0 0.0
    %403 = vmatpush2.msra.mxu0 0.0
    %404 = vmatprep.subr.mxu0 0.0
    %405 = vmatpush2.msra.mxu0 0.0
    %406 = vmatprep.subr.mxu0 0.0
    %407 = vmatpush2.msra.mxu0 0.0
    %408 = vmatprep.subr.mxu0 0.0
    %409 = vmatpush2.msra.mxu0 0.0
    %410 = vmatprep.subr.mxu0 0.0
    %411 = vmatpush2.msra.mxu0 0.0
    %412 = vmatprep.subr.mxu0 0.0
    %413 = vmatpush2.msra.mxu0 0.0
    %414 = vmatprep.mubr.f32.mxu0 0.0
    %415 = vmatmul.mubr.f32.gmra.mxu0 %v341
    %v416 = vpop.f32.mrf.mxu0
    %v417 = vadd.f32 0.0, %v416
    %v418 = vpop.f32.mrf.mxu0
    %419 = vmatprep.mubr.f32.mxu0 0.0
    %420 = vmatmul.mubr.f32.gmra.mxu0 %v344
    %v421 = vpop.f32.mrf.mxu0
    %v422 = vadd.f32 0.0, %v421
    %v423 = vpop.f32.mrf.mxu0
    %424 = vdwg.mxu0
    %425 = vrot.lane.b32.xlu0 %v299, 113
    %v426 = vpop.permute.xlu0 %425
    %427 = vrot.lane.b32.xlu0 %v300, 113
    %v428 = vpop.permute.xlu0 %427
    %431 = vxpose.xlu0.b32.start [1/16] %v426, 128
    %432 = vxpose.xlu0.b32.cont [2/16] %v428, 128
    %433 = vxpose.xlu0.b32.cont [3/16] 0.0, 128
    %434 = vxpose.xlu0.b32.cont [4/16] 0.0, 128
    %435 = vxpose.xlu0.b32.cont [5/16] 0.0, 128
    %436 = vxpose.xlu0.b32.cont [6/16] 0.0, 128
    %437 = vxpose.xlu0.b32.cont [7/16] 0.0, 128
    %438 = vxpose.xlu0.b32.cont [8/16] 0.0, 128
    %439 = vxpose.xlu0.b32.cont [9/16] 0.0, 128
    %440 = vxpose.xlu0.b32.cont [10/16] 0.0, 128
    %441 = vxpose.xlu0.b32.cont [11/16] 0.0, 128
    %442 = vxpose.xlu0.b32.cont [12/16] 0.0, 128
    %443 = vxpose.xlu0.b32.cont [13/16] 0.0, 128
    %444 = vxpose.xlu0.b32.cont [14/16] 0.0, 128
    %445 = vxpose.xlu0.b32.cont [15/16] 0.0, 128
    %446 = vxpose.xlu0.b32.end [16/16] 0.0, 128
    %v447 = vpop.trf.xlu0
    %v448 = vpop.trf.xlu0
    %v449 = vpop.trf.xlu0
    %v450 = vpop.trf.xlu0
    %v451 = vpop.trf.xlu0
    %v452 = vpop.trf.xlu0
    %v453 = vpop.trf.xlu0
    %v454 = vpop.trf.xlu0
    %v455 = vpop.trf.xlu0
    %v456 = vpop.trf.xlu0
    %v457 = vpop.trf.xlu0
    %v458 = vpop.trf.xlu0
    %v459 = vpop.trf.xlu0
    %v460 = vpop.trf.xlu0
    %v461 = vpop.trf.xlu0
    %v462 = vpop.trf.xlu0
    %465 = vrot.lane.b32.xlu0 %v447, 15
    %v466 = vpop.permute.xlu0 %465
    %467 = vrot.lane.b32.xlu0 %v448, 15
    %v468 = vpop.permute.xlu0 %467
    %v471 = vadd.f32 %v299, %v466
    %v472 = vadd.f32 %v300, %v468
    %v473 = vmul.f32 %v471, 0.5
    %v474 = vmul.f32 %v472, 0.5
    %v475 = vsel %vm339, %v426, 0
    %v477 = vsel %vm339, %v428, 0
    %479 = vmatprep.subr.mxu0 0.0
    %480 = vmatpush1.msra.mxu0 0.0
    %481 = vmatprep.subr.mxu0 0.0
    %482 = vmatpush1.msra.mxu0 0.0
    %483 = vmatprep.subr.mxu0 0.0
    %484 = vmatpush1.msra.mxu0 0.0
    %485 = vmatprep.subr.mxu0 0.0
    %486 = vmatpush1.msra.mxu0 0.0
    %487 = vmatprep.subr.mxu0 0.0
    %488 = vmatpush1.msra.mxu0 0.0
    %489 = vmatprep.subr.mxu0 0.0
    %490 = vmatpush1.msra.mxu0 0.0
    %491 = vmatprep.subr.mxu0 0.0
    %492 = vmatpush1.msra.mxu0 0.0
    %493 = vmatprep.subr.mxu0 0.0
    %494 = vmatpush1.msra.mxu0 0.0
    %495 = vmatprep.subr.mxu0 0.0
    %496 = vmatpush1.msra.mxu0 0.0
    %497 = vmatprep.subr.mxu0 0.0
    %498 = vmatpush1.msra.mxu0 0.0
    %499 = vmatprep.subr.mxu0 0.0
    %500 = vmatpush1.msra.mxu0 0.0
    %501 = vmatprep.subr.mxu0 0.0
    %502 = vmatpush1.msra.mxu0 0.0
    %503 = vmatprep.subr.mxu0 0.0
    %504 = vmatpush1.msra.mxu0 0.0
    %505 = vmatprep.subr.mxu0 0.0
    %506 = vmatpush1.msra.mxu0 0.0
    %507 = vmatprep.subr.mxu0 0.0
    %508 = vmatpush1.msra.mxu0 %v348
    %509 = vmatprep.subr.mxu0 0.0
    %510 = vmatpush1.msra.mxu0 %v49
    %511 = vmatprep.subr.mxu0 0.0
    %512 = vmatpush2.msra.mxu0 0.0
    %513 = vmatprep.subr.mxu0 0.0
    %514 = vmatpush2.msra.mxu0 0.0
    %515 = vmatprep.subr.mxu0 0.0
    %516 = vmatpush2.msra.mxu0 0.0
    %517 = vmatprep.subr.mxu0 0.0
    %518 = vmatpush2.msra.mxu0 0.0
    %519 = vmatprep.subr.mxu0 0.0
    %520 = vmatpush2.msra.mxu0 0.0
    %521 = vmatprep.subr.mxu0 0.0
    %522 = vmatpush2.msra.mxu0 0.0
    %523 = vmatprep.subr.mxu0 0.0
    %524 = vmatpush2.msra.mxu0 0.0
    %525 = vmatprep.subr.mxu0 0.0
    %526 = vmatpush2.msra.mxu0 0.0
    %527 = vmatprep.subr.mxu0 0.0
    %528 = vmatpush2.msra.mxu0 0.0
    %529 = vmatprep.subr.mxu0 0.0
    %530 = vmatpush2.msra.mxu0 0.0
    %531 = vmatprep.subr.mxu0 0.0
    %532 = vmatpush2.msra.mxu0 0.0
    %533 = vmatprep.subr.mxu0 0.0
    %534 = vmatpush2.msra.mxu0 0.0
    %535 = vmatprep.subr.mxu0 0.0
    %536 = vmatpush2.msra.mxu0 0.0
    %537 = vmatprep.subr.mxu0 0.0
    %538 = vmatpush2.msra.mxu0 0.0
    %539 = vmatprep.subr.mxu0 0.0
    %540 = vmatpush2.msra.mxu0 0.0
    %541 = vmatprep.subr.mxu0 0.0
    %542 = vmatpush2.msra.mxu0 0.0
    %543 = vmatprep.mubr.f32.mxu0 0.0
    %544 = vmatmul.mubr.f32.gmra.mxu0 %v475
    %v545 = vpop.f32.mrf.mxu0
    %v546 = vadd.f32 0.0, %v545
    %v547 = vpop.f32.mrf.mxu0
    %548 = vmatprep.mubr.f32.mxu0 0.0
    %549 = vmatmul.mubr.f32.gmra.mxu0 %v477
    %v550 = vpop.f32.mrf.mxu0
    %v551 = vadd.f32 0.0, %v550
    %v552 = vpop.f32.mrf.mxu0
    %553 = vdwg.mxu0
    %554 = vrot.lane.b32.xlu0 %v299, 98
    %v555 = vpop.permute.xlu0 %554
    %556 = vrot.lane.b32.xlu0 %v300, 98
    %v557 = vpop.permute.xlu0 %556
    %560 = vxpose.xlu0.b32.start [1/16] %v555, 128
    %561 = vxpose.xlu0.b32.cont [2/16] %v557, 128
    %562 = vxpose.xlu0.b32.cont [3/16] 0.0, 128
    %563 = vxpose.xlu0.b32.cont [4/16] 0.0, 128
    %564 = vxpose.xlu0.b32.cont [5/16] 0.0, 128
    %565 = vxpose.xlu0.b32.cont [6/16] 0.0, 128
    %566 = vxpose.xlu0.b32.cont [7/16] 0.0, 128
    %567 = vxpose.xlu0.b32.cont [8/16] 0.0, 128
    %568 = vxpose.xlu0.b32.cont [9/16] 0.0, 128
    %569 = vxpose.xlu0.b32.cont [10/16] 0.0, 128
    %570 = vxpose.xlu0.b32.cont [11/16] 0.0, 128
    %571 = vxpose.xlu0.b32.cont [12/16] 0.0, 128
    %572 = vxpose.xlu0.b32.cont [13/16] 0.0, 128
    %573 = vxpose.xlu0.b32.cont [14/16] 0.0, 128
    %574 = vxpose.xlu0.b32.cont [15/16] 0.0, 128
    %575 = vxpose.xlu0.b32.end [16/16] 0.0, 128
    %v576 = vpop.trf.xlu0
    %v577 = vpop.trf.xlu0
    %v578 = vpop.trf.xlu0
    %v579 = vpop.trf.xlu0
    %v580 = vpop.trf.xlu0
    %v581 = vpop.trf.xlu0
    %v582 = vpop.trf.xlu0
    %v583 = vpop.trf.xlu0
    %v584 = vpop.trf.xlu0
    %v585 = vpop.trf.xlu0
    %v586 = vpop.trf.xlu0
    %v587 = vpop.trf.xlu0
    %v588 = vpop.trf.xlu0
    %v589 = vpop.trf.xlu0
    %v590 = vpop.trf.xlu0
    %v591 = vpop.trf.xlu0
    %594 = vrot.lane.b32.xlu0 %v576, 30
    %v595 = vpop.permute.xlu0 %594
    %596 = vrot.lane.b32.xlu0 %v577, 30
    %v597 = vpop.permute.xlu0 %596
    %v600 = vadd.f32 %v299, %v595
    %v601 = vadd.f32 %v300, %v597
    %v602 = vmul.f32 %v600, 0.5
    %v603 = vmul.f32 %v601, 0.5
    %v604 = vsel %vm339, %v555, 0
    %v606 = vsel %vm339, %v557, 0
    %608 = vmatprep.subr.mxu0 0.0
    %609 = vmatpush1.msra.mxu0 0.0
    %610 = vmatprep.subr.mxu0 0.0
    %611 = vmatpush1.msra.mxu0 0.0
    %612 = vmatprep.subr.mxu0 0.0
    %613 = vmatpush1.msra.mxu0 0.0
    %614 = vmatprep.subr.mxu0 0.0
    %615 = vmatpush1.msra.mxu0 0.0
    %616 = vmatprep.subr.mxu0 0.0
    %617 = vmatpush1.msra.mxu0 0.0
    %618 = vmatprep.subr.mxu0 0.0
    %619 = vmatpush1.msra.mxu0 0.0
    %620 = vmatprep.subr.mxu0 0.0
    %621 = vmatpush1.msra.mxu0 0.0
    %622 = vmatprep.subr.mxu0 0.0
    %623 = vmatpush1.msra.mxu0 0.0
    %624 = vmatprep.subr.mxu0 0.0
    %625 = vmatpush1.msra.mxu0 0.0
    %626 = vmatprep.subr.mxu0 0.0
    %627 = vmatpush1.msra.mxu0 0.0
    %628 = vmatprep.subr.mxu0 0.0
    %629 = vmatpush1.msra.mxu0 0.0
    %630 = vmatprep.subr.mxu0 0.0
    %631 = vmatpush1.msra.mxu0 0.0
    %632 = vmatprep.subr.mxu0 0.0
    %633 = vmatpush1.msra.mxu0 0.0
    %634 = vmatprep.subr.mxu0 0.0
    %635 = vmatpush1.msra.mxu0 0.0
    %636 = vmatprep.subr.mxu0 0.0
    %637 = vmatpush1.msra.mxu0 %v348
    %638 = vmatprep.subr.mxu0 0.0
    %639 = vmatpush1.msra.mxu0 %v49
    %640 = vmatprep.subr.mxu0 0.0
    %641 = vmatpush2.msra.mxu0 0.0
    %642 = vmatprep.subr.mxu0 0.0
    %643 = vmatpush2.msra.mxu0 0.0
    %644 = vmatprep.subr.mxu0 0.0
    %645 = vmatpush2.msra.mxu0 0.0
    %646 = vmatprep.subr.mxu0 0.0
    %647 = vmatpush2.msra.mxu0 0.0
    %648 = vmatprep.subr.mxu0 0.0
    %649 = vmatpush2.msra.mxu0 0.0
    %650 = vmatprep.subr.mxu0 0.0
    %651 = vmatpush2.msra.mxu0 0.0
    %652 = vmatprep.subr.mxu0 0.0
    %653 = vmatpush2.msra.mxu0 0.0
    %654 = vmatprep.subr.mxu0 0.0
    %655 = vmatpush2.msra.mxu0 0.0
    %656 = vmatprep.subr.mxu0 0.0
    %657 = vmatpush2.msra.mxu0 0.0
    %658 = vmatprep.subr.mxu0 0.0
    %659 = vmatpush2.msra.mxu0 0.0
    %660 = vmatprep.subr.mxu0 0.0
    %661 = vmatpush2.msra.mxu0 0.0
    %662 = vmatprep.subr.mxu0 0.0
    %663 = vmatpush2.msra.mxu0 0.0
    %664 = vmatprep.subr.mxu0 0.0
    %665 = vmatpush2.msra.mxu0 0.0
    %666 = vmatprep.subr.mxu0 0.0
    %667 = vmatpush2.msra.mxu0 0.0
    %668 = vmatprep.subr.mxu0 0.0
    %669 = vmatpush2.msra.mxu0 0.0
    %670 = vmatprep.subr.mxu0 0.0
    %671 = vmatpush2.msra.mxu0 0.0
    %672 = vmatprep.mubr.f32.mxu0 0.0
    %673 = vmatmul.mubr.f32.gmra.mxu0 %v604
    %v674 = vpop.f32.mrf.mxu0
    %v675 = vadd.f32 0.0, %v674
    %v676 = vpop.f32.mrf.mxu0
    %677 = vmatprep.mubr.f32.mxu0 0.0
    %678 = vmatmul.mubr.f32.gmra.mxu0 %v606
    %v679 = vpop.f32.mrf.mxu0
    %v680 = vadd.f32 0.0, %v679
    %v681 = vpop.f32.mrf.mxu0
    %682 = vdwg.mxu0
    %v683 = vsel %vm339, %v337, %v473
    %v684 = vsel %vm339, %v338, %v474
    %vm685 = vcmask 244736
    %v686 = vsel %vm685, %v683, %v602
    %v687 = vsel %vm685, %v684, %v603
    %vm690 = vcmask 1040384
    %v691 = vrot.slane %v300, 7
    %v692 = vrot.slane %v301, 7
    %v693 = vsel %vm690, %v691, %v692
    %v694 = vrot.slane %v302, 7
    %v695 = vsel %vm690, %v692, %v694
    %698 = vxpose.xlu0.b32.start [1/16] %v693, 128
    %699 = vxpose.xlu0.b32.cont [2/16] %v695, 128
    %700 = vxpose.xlu0.b32.cont [3/16] 0.0, 128
    %701 = vxpose.xlu0.b32.cont [4/16] 0.0, 128
    %702 = vxpose.xlu0.b32.cont [5/16] 0.0, 128
    %703 = vxpose.xlu0.b32.cont [6/16] 0.0, 128
    %704 = vxpose.xlu0.b32.cont [7/16] 0.0, 128
    %705 = vxpose.xlu0.b32.cont [8/16] 0.0, 128
    %706 = vxpose.xlu0.b32.cont [9/16] 0.0, 128
    %707 = vxpose.xlu0.b32.cont [10/16] 0.0, 128
    %708 = vxpose.xlu0.b32.cont [11/16] 0.0, 128
    %709 = vxpose.xlu0.b32.cont [12/16] 0.0, 128
    %710 = vxpose.xlu0.b32.cont [13/16] 0.0, 128
    %711 = vxpose.xlu0.b32.cont [14/16] 0.0, 128
    %712 = vxpose.xlu0.b32.cont [15/16] 0.0, 128
    %713 = vxpose.xlu0.b32.end [16/16] 0.0, 128
    %v714 = vpop.trf.xlu0
    %v715 = vpop.trf.xlu0
    %v716 = vpop.trf.xlu0
    %v717 = vpop.trf.xlu0
    %v718 = vpop.trf.xlu0
    %v719 = vpop.trf.xlu0
    %v720 = vpop.trf.xlu0
    %v721 = vpop.trf.xlu0
    %v722 = vpop.trf.xlu0
    %v723 = vpop.trf.xlu0
    %v724 = vpop.trf.xlu0
    %v725 = vpop.trf.xlu0
    %v726 = vpop.trf.xlu0
    %v727 = vpop.trf.xlu0
    %v728 = vpop.trf.xlu0
    %v729 = vpop.trf.xlu0
    %v732 = vrot.slane %v714, 1
    %v733 = vrot.slane %v715, 1
    %v734 = vsel %vm346, %v732, %v733
    %v738 = vadd.f32 %v300, %v732
    %v739 = vadd.f32 %v301, %v734
    %v740 = vadd.f32 %v302, %v733
    %v741 = vmul.f32 %v738, 0.5
    %v742 = vmul.f32 %v739, 0.5
    %v743 = vmul.f32 %v740, 0.5
    %v746 = vrot.slane %v50, 7
    %v747 = vrot.slane %v51, 7
    %v748 = vsel %vm690, %v746, %v747
    %v749 = vrot.slane %v52, 7
    %v750 = vsel %vm690, %v747, %v749
    %v752 = vsel %vm339, %v693, 0
    %v754 = vsel %vm339, %v695, 0
    %v756 = vsel %vm346, %v750, 0
    %758 = vmatprep.subr.mxu0 0.0
    %759 = vmatpush1.msra.mxu0 0.0
    %760 = vmatprep.subr.mxu0 0.0
    %761 = vmatpush1.msra.mxu0 0.0
    %762 = vmatprep.subr.mxu0 0.0
    %763 = vmatpush1.msra.mxu0 0.0
    %764 = vmatprep.subr.mxu0 0.0
    %765 = vmatpush1.msra.mxu0 0.0
    %766 = vmatprep.subr.mxu0 0.0
    %767 = vmatpush1.msra.mxu0 0.0
    %768 = vmatprep.subr.mxu0 0.0
    %769 = vmatpush1.msra.mxu0 0.0
    %770 = vmatprep.subr.mxu0 0.0
    %771 = vmatpush1.msra.mxu0 0.0
    %772 = vmatprep.subr.mxu0 0.0
    %773 = vmatpush1.msra.mxu0 0.0
    %774 = vmatprep.subr.mxu0 0.0
    %775 = vmatpush1.msra.mxu0 0.0
    %776 = vmatprep.subr.mxu0 0.0
    %777 = vmatpush1.msra.mxu0 0.0
    %778 = vmatprep.subr.mxu0 0.0
    %779 = vmatpush1.msra.mxu0 0.0
    %780 = vmatprep.subr.mxu0 0.0
    %781 = vmatpush1.msra.mxu0 0.0
    %782 = vmatprep.subr.mxu0 0.0
    %783 = vmatpush1.msra.mxu0 0.0
    %784 = vmatprep.subr.mxu0 0.0
    %785 = vmatpush1.msra.mxu0 0.0
    %786 = vmatprep.subr.mxu0 0.0
    %787 = vmatpush1.msra.mxu0 %v756
    %788 = vmatprep.subr.mxu0 0.0
    %789 = vmatpush1.msra.mxu0 %v748
    %790 = vmatprep.subr.mxu0 0.0
    %791 = vmatpush2.msra.mxu0 0.0
    %792 = vmatprep.subr.mxu0 0.0
    %793 = vmatpush2.msra.mxu0 0.0
    %794 = vmatprep.subr.mxu0 0.0
    %795 = vmatpush2.msra.mxu0 0.0
    %796 = vmatprep.subr.mxu0 0.0
    %797 = vmatpush2.msra.mxu0 0.0
    %798 = vmatprep.subr.mxu0 0.0
    %799 = vmatpush2.msra.mxu0 0.0
    %800 = vmatprep.subr.mxu0 0.0
    %801 = vmatpush2.msra.mxu0 0.0
    %802 = vmatprep.subr.mxu0 0.0
    %803 = vmatpush2.msra.mxu0 0.0
    %804 = vmatprep.subr.mxu0 0.0
    %805 = vmatpush2.msra.mxu0 0.0
    %806 = vmatprep.subr.mxu0 0.0
    %807 = vmatpush2.msra.mxu0 0.0
    %808 = vmatprep.subr.mxu0 0.0
    %809 = vmatpush2.msra.mxu0 0.0
    %810 = vmatprep.subr.mxu0 0.0
    %811 = vmatpush2.msra.mxu0 0.0
    %812 = vmatprep.subr.mxu0 0.0
    %813 = vmatpush2.msra.mxu0 0.0
    %814 = vmatprep.subr.mxu0 0.0
    %815 = vmatpush2.msra.mxu0 0.0
    %816 = vmatprep.subr.mxu0 0.0
    %817 = vmatpush2.msra.mxu0 0.0
    %818 = vmatprep.subr.mxu0 0.0
    %819 = vmatpush2.msra.mxu0 0.0
    %820 = vmatprep.subr.mxu0 0.0
    %821 = vmatpush2.msra.mxu0 0.0
    %822 = vmatprep.mubr.f32.mxu0 0.0
    %823 = vmatmul.mubr.f32.gmra.mxu0 %v752
    %v824 = vpop.f32.mrf.mxu0
    %v825 = vadd.f32 0.0, %v824
    %v826 = vpop.f32.mrf.mxu0
    %827 = vmatprep.mubr.f32.mxu0 0.0
    %828 = vmatmul.mubr.f32.gmra.mxu0 %v754
    %v829 = vpop.f32.mrf.mxu0
    %v830 = vadd.f32 0.0, %v829
    %v831 = vpop.f32.mrf.mxu0
    %832 = vdwg.mxu0
    %833 = vrot.lane.b32.xlu0 %v693, 113
    %v834 = vpop.permute.xlu0 %833
    %835 = vrot.lane.b32.xlu0 %v695, 113
    %v836 = vpop.permute.xlu0 %835
    %839 = vxpose.xlu0.b32.start [1/16] %v834, 128
    %840 = vxpose.xlu0.b32.cont [2/16] %v836, 128
    %841 = vxpose.xlu0.b32.cont [3/16] 0.0, 128
    %842 = vxpose.xlu0.b32.cont [4/16] 0.0, 128
    %843 = vxpose.xlu0.b32.cont [5/16] 0.0, 128
    %844 = vxpose.xlu0.b32.cont [6/16] 0.0, 128
    %845 = vxpose.xlu0.b32.cont [7/16] 0.0, 128
    %846 = vxpose.xlu0.b32.cont [8/16] 0.0, 128
    %847 = vxpose.xlu0.b32.cont [9/16] 0.0, 128
    %848 = vxpose.xlu0.b32.cont [10/16] 0.0, 128
    %849 = vxpose.xlu0.b32.cont [11/16] 0.0, 128
    %850 = vxpose.xlu0.b32.cont [12/16] 0.0, 128
    %851 = vxpose.xlu0.b32.cont [13/16] 0.0, 128
    %852 = vxpose.xlu0.b32.cont [14/16] 0.0, 128
    %853 = vxpose.xlu0.b32.cont [15/16] 0.0, 128
    %854 = vxpose.xlu0.b32.end [16/16] 0.0, 128
    %v855 = vpop.trf.xlu0
    %v856 = vpop.trf.xlu0
    %v857 = vpop.trf.xlu0
    %v858 = vpop.trf.xlu0
    %v859 = vpop.trf.xlu0
    %v860 = vpop.trf.xlu0
    %v861 = vpop.trf.xlu0
    %v862 = vpop.trf.xlu0
    %v863 = vpop.trf.xlu0
    %v864 = vpop.trf.xlu0
    %v865 = vpop.trf.xlu0
    %v866 = vpop.trf.xlu0
    %v867 = vpop.trf.xlu0
    %v868 = vpop.trf.xlu0
    %v869 = vpop.trf.xlu0
    %v870 = vpop.trf.xlu0
    %v873 = vrot.slane %v855, 1
    %v874 = vrot.slane %v856, 1
    %v875 = vsel %vm346, %v873, %v874
    %876 = vrot.lane.b32.xlu0 %v873, 15
    %v877 = vpop.permute.xlu0 %876
    %878 = vrot.lane.b32.xlu0 %v875, 15
    %v879 = vpop.permute.xlu0 %878
    %880 = vrot.lane.b32.xlu0 %v874, 15
    %v881 = vpop.permute.xlu0 %880
    %v885 = vadd.f32 %v300, %v877
    %v886 = vadd.f32 %v301, %v879
    %v887 = vadd.f32 %v302, %v881
    %v888 = vmul.f32 %v885, 0.5
    %v889 = vmul.f32 %v886, 0.5
    %v890 = vmul.f32 %v887, 0.5
    %v891 = vsel %vm339, %v834, 0
    %v893 = vsel %vm339, %v836, 0
    %895 = vmatprep.subr.mxu0 0.0
    %896 = vmatpush1.msra.mxu0 0.0
    %897 = vmatprep.subr.mxu0 0.0
    %898 = vmatpush1.msra.mxu0 0.0
    %899 = vmatprep.subr.mxu0 0.0
    %900 = vmatpush1.msra.mxu0 0.0
    %901 = vmatprep.subr.mxu0 0.0
    %902 = vmatpush1.msra.mxu0 0.0
    %903 = vmatprep.subr.mxu0 0.0
    %904 = vmatpush1.msra.mxu0 0.0
    %905 = vmatprep.subr.mxu0 0.0
    %906 = vmatpush1.msra.mxu0 0.0
    %907 = vmatprep.subr.mxu0 0.0
    %908 = vmatpush1.msra.mxu0 0.0
    %909 = vmatprep.subr.mxu0 0.0
    %910 = vmatpush1.msra.mxu0 0.0
    %911 = vmatprep.subr.mxu0 0.0
    %912 = vmatpush1.msra.mxu0 0.0
    %913 = vmatprep.subr.mxu0 0.0
    %914 = vmatpush1.msra.mxu0 0.0
    %915 = vmatprep.subr.mxu0 0.0
    %916 = vmatpush1.msra.mxu0 0.0
    %917 = vmatprep.subr.mxu0 0.0
    %918 = vmatpush1.msra.mxu0 0.0
    %919 = vmatprep.subr.mxu0 0.0
    %920 = vmatpush1.msra.mxu0 0.0
    %921 = vmatprep.subr.mxu0 0.0
    %922 = vmatpush1.msra.mxu0 0.0
    %923 = vmatprep.subr.mxu0 0.0
    %924 = vmatpush1.msra.mxu0 %v756
    %925 = vmatprep.subr.mxu0 0.0
    %926 = vmatpush1.msra.mxu0 %v748
    %927 = vmatprep.subr.mxu0 0.0
    %928 = vmatpush2.msra.mxu0 0.0
    %929 = vmatprep.subr.mxu0 0.0
    %930 = vmatpush2.msra.mxu0 0.0
    %931 = vmatprep.subr.mxu0 0.0
    %932 = vmatpush2.msra.mxu0 0.0
    %933 = vmatprep.subr.mxu0 0.0
    %934 = vmatpush2.msra.mxu0 0.0
    %935 = vmatprep.subr.mxu0 0.0
    %936 = vmatpush2.msra.mxu0 0.0
    %937 = vmatprep.subr.mxu0 0.0
    %938 = vmatpush2.msra.mxu0 0.0
    %939 = vmatprep.subr.mxu0 0.0
    %940 = vmatpush2.msra.mxu0 0.0
    %941 = vmatprep.subr.mxu0 0.0
    %942 = vmatpush2.msra.mxu0 0.0
    %943 = vmatprep.subr.mxu0 0.0
    %944 = vmatpush2.msra.mxu0 0.0
    %945 = vmatprep.subr.mxu0 0.0
    %946 = vmatpush2.msra.mxu0 0.0
    %947 = vmatprep.subr.mxu0 0.0
    %948 = vmatpush2.msra.mxu0 0.0
    %949 = vmatprep.subr.mxu0 0.0
    %950 = vmatpush2.msra.mxu0 0.0
    %951 = vmatprep.subr.mxu0 0.0
    %952 = vmatpush2.msra.mxu0 0.0
    %953 = vmatprep.subr.mxu0 0.0
    %954 = vmatpush2.msra.mxu0 0.0
    %955 = vmatprep.subr.mxu0 0.0
    %956 = vmatpush2.msra.mxu0 0.0
    %957 = vmatprep.subr.mxu0 0.0
    %958 = vmatpush2.msra.mxu0 0.0
    %959 = vmatprep.mubr.f32.mxu0 0.0
    %960 = vmatmul.mubr.f32.gmra.mxu0 %v891
    %v961 = vpop.f32.mrf.mxu0
    %v962 = vadd.f32 0.0, %v961
    %v963 = vpop.f32.mrf.mxu0
    %964 = vmatprep.mubr.f32.mxu0 0.0
    %965 = vmatmul.mubr.f32.gmra.mxu0 %v893
    %v966 = vpop.f32.mrf.mxu0
    %v967 = vadd.f32 0.0, %v966
    %v968 = vpop.f32.mrf.mxu0
    %969 = vdwg.mxu0
    %970 = vrot.lane.b32.xlu0 %v693, 98
    %v971 = vpop.permute.xlu0 %970
    %972 = vrot.lane.b32.xlu0 %v695, 98
    %v973 = vpop.permute.xlu0 %972
    %976 = vxpose.xlu0.b32.start [1/16] %v971, 128
    %977 = vxpose.xlu0.b32.cont [2/16] %v973, 128
    %978 = vxpose.xlu0.b32.cont [3/16] 0.0, 128
    %979 = vxpose.xlu0.b32.cont [4/16] 0.0, 128
    %980 = vxpose.xlu0.b32.cont [5/16] 0.0, 128
    %981 = vxpose.xlu0.b32.cont [6/16] 0.0, 128
    %982 = vxpose.xlu0.b32.cont [7/16] 0.0, 128
    %983 = vxpose.xlu0.b32.cont [8/16] 0.0, 128
    %984 = vxpose.xlu0.b32.cont [9/16] 0.0, 128
    %985 = vxpose.xlu0.b32.cont [10/16] 0.0, 128
    %986 = vxpose.xlu0.b32.cont [11/16] 0.0, 128
    %987 = vxpose.xlu0.b32.cont [12/16] 0.0, 128
    %988 = vxpose.xlu0.b32.cont [13/16] 0.0, 128
    %989 = vxpose.xlu0.b32.cont [14/16] 0.0, 128
    %990 = vxpose.xlu0.b32.cont [15/16] 0.0, 128
    %991 = vxpose.xlu0.b32.end [16/16] 0.0, 128
    %v992 = vpop.trf.xlu0
    %v993 = vpop.trf.xlu0
    %v994 = vpop.trf.xlu0
    %v995 = vpop.trf.xlu0
    %v996 = vpop.trf.xlu0
    %v997 = vpop.trf.xlu0
    %v998 = vpop.trf.xlu0
    %v999 = vpop.trf.xlu0
    %v1000 = vpop.trf.xlu0
    %v1001 = vpop.trf.xlu0
    %v1002 = vpop.trf.xlu0
    %v1003 = vpop.trf.xlu0
    %v1004 = vpop.trf.xlu0
    %v1005 = vpop.trf.xlu0
    %v1006 = vpop.trf.xlu0
    %v1007 = vpop.trf.xlu0
    %v1010 = vrot.slane %v992, 1
    %v1011 = vrot.slane %v993, 1
    %v1012 = vsel %vm346, %v1010, %v1011
    %1013 = vrot.lane.b32.xlu0 %v1010, 30
    %v1014 = vpop.permute.xlu0 %1013
    %1015 = vrot.lane.b32.xlu0 %v1012, 30
    %v1016 = vpop.permute.xlu0 %1015
    %1017 = vrot.lane.b32.xlu0 %v1011, 30
    %v1018 = vpop.permute.xlu0 %1017
    %v1022 = vadd.f32 %v300, %v1014
    %v1023 = vadd.f32 %v301, %v1016
    %v1024 = vadd.f32 %v302, %v1018
    %v1025 = vmul.f32 %v1022, 0.5
    %v1026 = vmul.f32 %v1023, 0.5
    %v1027 = vmul.f32 %v1024, 0.5
    %v1028 = vsel %vm339, %v971, 0
    %v1030 = vsel %vm339, %v973, 0
    %1032 = vmatprep.subr.mxu0 0.0
    %1033 = vmatpush1.msra.mxu0 0.0
    %1034 = vmatprep.subr.mxu0 0.0
    %1035 = vmatpush1.msra.mxu0 0.0
    %1036 = vmatprep.subr.mxu0 0.0
    %1037 = vmatpush1.msra.mxu0 0.0
    %1038 = vmatprep.subr.mxu0 0.0
    %1039 = vmatpush1.msra.mxu0 0.0
    %1040 = vmatprep.subr.mxu0 0.0
    %1041 = vmatpush1.msra.mxu0 0.0
    %1042 = vmatprep.subr.mxu0 0.0
    %1043 = vmatpush1.msra.mxu0 0.0
    %1044 = vmatprep.subr.mxu0 0.0
    %1045 = vmatpush1.msra.mxu0 0.0
    %1046 = vmatprep.subr.mxu0 0.0
    %1047 = vmatpush1.msra.mxu0 0.0
    %1048 = vmatprep.subr.mxu0 0.0
    %1049 = vmatpush1.msra.mxu0 0.0
    %1050 = vmatprep.subr.mxu0 0.0
    %1051 = vmatpush1.msra.mxu0 0.0
    %1052 = vmatprep.subr.mxu0 0.0
    %1053 = vmatpush1.msra.mxu0 0.0
    %1054 = vmatprep.subr.mxu0 0.0
    %1055 = vmatpush1.msra.mxu0 0.0
    %1056 = vmatprep.subr.mxu0 0.0
    %1057 = vmatpush1.msra.mxu0 0.0
    %1058 = vmatprep.subr.mxu0 0.0
    %1059 = vmatpush1.msra.mxu0 0.0
    %1060 = vmatprep.subr.mxu0 0.0
    %1061 = vmatpush1.msra.mxu0 %v756
    %1062 = vmatprep.subr.mxu0 0.0
    %1063 = vmatpush1.msra.mxu0 %v748
    %1064 = vmatprep.subr.mxu0 0.0
    %1065 = vmatpush2.msra.mxu0 0.0
    %1066 = vmatprep.subr.mxu0 0.0
    %1067 = vmatpush2.msra.mxu0 0.0
    %1068 = vmatprep.subr.mxu0 0.0
    %1069 = vmatpush2.msra.mxu0 0.0
    %1070 = vmatprep.subr.mxu0 0.0
    %1071 = vmatpush2.msra.mxu0 0.0
    %1072 = vmatprep.subr.mxu0 0.0
    %1073 = vmatpush2.msra.mxu0 0.0
    %1074 = vmatprep.subr.mxu0 0.0
    %1075 = vmatpush2.msra.mxu0 0.0
    %1076 = vmatprep.subr.mxu0 0.0
    %1077 = vmatpush2.msra.mxu0 0.0
    %1078 = vmatprep.subr.mxu0 0.0
    %1079 = vmatpush2.msra.mxu0 0.0
    %1080 = vmatprep.subr.mxu0 0.0
    %1081 = vmatpush2.msra.mxu0 0.0
    %1082 = vmatprep.subr.mxu0 0.0
    %1083 = vmatpush2.msra.mxu0 0.0
    %1084 = vmatprep.subr.mxu0 0.0
    %1085 = vmatpush2.msra.mxu0 0.0
    %1086 = vmatprep.subr.mxu0 0.0
    %1087 = vmatpush2.msra.mxu0 0.0
    %1088 = vmatprep.subr.mxu0 0.0
    %1089 = vmatpush2.msra.mxu0 0.0
    %1090 = vmatprep.subr.mxu0 0.0
    %1091 = vmatpush2.msra.mxu0 0.0
    %1092 = vmatprep.subr.mxu0 0.0
    %1093 = vmatpush2.msra.mxu0 0.0
    %1094 = vmatprep.subr.mxu0 0.0
    %1095 = vmatpush2.msra.mxu0 0.0
    %1096 = vmatprep.mubr.f32.mxu0 0.0
    %1097 = vmatmul.mubr.f32.gmra.mxu0 %v1028
    %v1098 = vpop.f32.mrf.mxu0
    %v1099 = vadd.f32 0.0, %v1098
    %v1100 = vpop.f32.mrf.mxu0
    %1101 = vmatprep.mubr.f32.mxu0 0.0
    %1102 = vmatmul.mubr.f32.gmra.mxu0 %v1030
    %v1103 = vpop.f32.mrf.mxu0
    %v1104 = vadd.f32 0.0, %v1103
    %v1105 = vpop.f32.mrf.mxu0
    %1106 = vdwg.mxu0
    %v1107 = vsel %vm339, %v741, %v888
    %v1108 = vsel %vm339, %v742, %v889
    %v1109 = vsel %vm339, %v743, %v890
    %v1110 = vsel %vm685, %v1107, %v1025
    %v1111 = vsel %vm685, %v1108, %v1026
    %v1112 = vsel %vm685, %v1109, %v1027
    %v1113 = vsel %vm346, %v687, %v1110
    %v1116 = vrot.slane %v825, 1
    %v1117 = vrot.slane %v830, 1
    %v1118 = vsel %vm346, %v1116, %v1117
    %v1122 = vsel %vm346, %v422, %v1116
    %v1125 = vrot.slane %v962, 1
    %v1126 = vrot.slane %v967, 1
    %v1127 = vsel %vm346, %v1125, %v1126
    %v1131 = vsel %vm346, %v551, %v1125
    %v1134 = vrot.slane %v1099, 1
    %v1135 = vrot.slane %v1104, 1
    %v1136 = vsel %vm346, %v1134, %v1135
    %v1140 = vsel %vm346, %v680, %v1134
    %v1141 = vld [vmem:[%s4] sm:$0xff]
    %v1142 = vld [vmem:[%s4 + $0x8] sm:$0xff]
    %v1143 = vld [vmem:[%s4 + $0x10] sm:$0xff]
    %v1144 = vld [vmem:[%s4 + $0x18] sm:$0xff]
    %v1145 = vld [vmem:[%s4 + $0x20] sm:$0xff]
    %v1146 = vld [vmem:[%s4 + $0x28] sm:$0x1f]
    %v1147 = vlaneseq
    %v1148 = vshrl.u32 %v1147, 7
    %v1149 = vsub.s32 2, %v1148
    %v1150 = vrot.slane %v53, %v1149
    %v1152 = vsel %vm68, %v686, 0
    %v1155 = vsel %vm68, %v1113, 0
    %v1158 = vsel %vm68, %v1111, 0
    %v1161 = vsel %vm68, %v1112, 0
    %v1164 = vsel %vm81, %v1146, 0
    %1166 = vmatprep.subr.mxu0 0.0
    %1167 = vmatpush1.msra.mxu0 0.0
    %1168 = vmatprep.subr.mxu0 0.0
    %1169 = vmatpush1.msra.mxu0 0.0
    %1170 = vmatprep.subr.mxu0 0.0
    %1171 = vmatpush1.msra.mxu0 0.0
    %1172 = vmatprep.subr.mxu0 0.0
    %1173 = vmatpush1.msra.mxu0 0.0
    %1174 = vmatprep.subr.mxu0 0.0
    %1175 = vmatpush1.msra.mxu0 0.0
    %1176 = vmatprep.subr.mxu0 0.0
    %1177 = vmatpush1.msra.mxu0 0.0
    %1178 = vmatprep.subr.mxu0 0.0
    %1179 = vmatpush1.msra.mxu0 0.0
    %1180 = vmatprep.subr.mxu0 0.0
    %1181 = vmatpush1.msra.mxu0 0.0
    %1182 = vmatprep.subr.mxu0 0.0
    %1183 = vmatpush1.msra.mxu0 0.0
    %1184 = vmatprep.subr.mxu0 0.0
    %1185 = vmatpush1.msra.mxu0 0.0
    %1186 = vmatprep.subr.mxu0 0.0
    %1187 = vmatpush1.msra.mxu0 %v1164
    %1188 = vmatprep.subr.mxu0 0.0
    %1189 = vmatpush1.msra.mxu0 %v1145
    %1190 = vmatprep.subr.mxu0 0.0
    %1191 = vmatpush1.msra.mxu0 %v1144
    %1192 = vmatprep.subr.mxu0 0.0
    %1193 = vmatpush1.msra.mxu0 %v1143
    %1194 = vmatprep.subr.mxu0 0.0
    %1195 = vmatpush1.msra.mxu0 %v1142
    %1196 = vmatprep.subr.mxu0 0.0
    %1197 = vmatpush1.msra.mxu0 %v1141
    %1198 = vmatprep.subr.mxu0 0.0
    %1199 = vmatpush2.msra.mxu0 0.0
    %1200 = vmatprep.subr.mxu0 0.0
    %1201 = vmatpush2.msra.mxu0 0.0
    %1202 = vmatprep.subr.mxu0 0.0
    %1203 = vmatpush2.msra.mxu0 0.0
    %1204 = vmatprep.subr.mxu0 0.0
    %1205 = vmatpush2.msra.mxu0 0.0
    %1206 = vmatprep.subr.mxu0 0.0
    %1207 = vmatpush2.msra.mxu0 0.0
    %1208 = vmatprep.subr.mxu0 0.0
    %1209 = vmatpush2.msra.mxu0 0.0
    %1210 = vmatprep.subr.mxu0 0.0
    %1211 = vmatpush2.msra.mxu0 0.0
    %1212 = vmatprep.subr.mxu0 0.0
    %1213 = vmatpush2.msra.mxu0 0.0
    %1214 = vmatprep.subr.mxu0 0.0
    %1215 = vmatpush2.msra.mxu0 0.0
    %1216 = vmatprep.subr.mxu0 0.0
    %1217 = vmatpush2.msra.mxu0 0.0
    %1218 = vmatprep.subr.mxu0 0.0
    %1219 = vmatpush2.msra.mxu0 0.0
    %1220 = vmatprep.subr.mxu0 0.0
    %1221 = vmatpush2.msra.mxu0 0.0
    %1222 = vmatprep.subr.mxu0 0.0
    %1223 = vmatpush2.msra.mxu0 0.0
    %1224 = vmatprep.subr.mxu0 0.0
    %1225 = vmatpush2.msra.mxu0 0.0
    %1226 = vmatprep.subr.mxu0 0.0
    %1227 = vmatpush2.msra.mxu0 0.0
    %1228 = vmatprep.subr.mxu0 0.0
    %1229 = vmatpush2.msra.mxu0 0.0
    %1230 = vmatprep.mubr.f32.mxu0 0.0
    %1231 = vmatmul.mubr.f32.gmra.mxu0 %v1152
    %v1232 = vpop.f32.mrf.mxu0
    %v1233 = vadd.f32 %v1150, %v1232
    %v1234 = vpop.f32.mrf.mxu0
    %1235 = vmatprep.mubr.f32.mxu0 0.0
    %1236 = vmatmul.mubr.f32.gmra.mxu0 %v1155
    %v1237 = vpop.f32.mrf.mxu0
    %v1238 = vadd.f32 %v1150, %v1237
    %v1239 = vpop.f32.mrf.mxu0
    %1240 = vmatprep.mubr.f32.mxu0 0.0
    %1241 = vmatmul.mubr.f32.gmra.mxu0 %v1158
    %v1242 = vpop.f32.mrf.mxu0
    %v1243 = vadd.f32 %v1150, %v1242
    %v1244 = vpop.f32.mrf.mxu0
    %1245 = vmatprep.mubr.f32.mxu0 0.0
    %1246 = vmatmul.mubr.f32.gmra.mxu0 %v1161
    %v1247 = vpop.f32.mrf.mxu0
    %v1248 = vadd.f32 %v1150, %v1247
    %v1249 = vpop.f32.mrf.mxu0
    %1250 = vdwg.mxu0
    %vm1251 = vcmp.gt.f32.partialorder %v1233, 0.0
    %vm1252 = vcmp.gt.f32.partialorder %v1238, 0.0
    %vm1253 = vcmp.gt.f32.partialorder %v1243, 0.0
    %vm1254 = vcmp.gt.f32.partialorder %v1248, 0.0
    %v1255 = vmin.f32 %v1233, 0.0
    %v1256 = vmin.f32 %v1238, 0.0
    %v1257 = vmin.f32 %v1243, 0.0
    %v1258 = vmin.f32 %v1248, 0.0
    %v1259 = vmul.f32 %v1255, 1.442695
    %v1260 = vpow.pop %v1259
    %v1261 = vmul.f32 %v1256, 1.442695
    %v1262 = vpow.pop %v1261
    %v1263 = vmul.f32 %v1257, 1.442695
    %v1264 = vpow.pop %v1263
    %v1265 = vmul.f32 %v1258, 1.442695
    %v1266 = vpow.pop %v1265
    %v1267 = vsub.f32 %v1260, 1.0
    %v1268 = vsub.f32 %v1262, 1.0
    %v1269 = vsub.f32 %v1264, 1.0
    %v1270 = vsub.f32 %v1266, 1.0
    %v1271 = vsel %vm1251, %v1233, %v1267
    %v1272 = vsel %vm1252, %v1238, %v1268
    %v1273 = vsel %vm1253, %v1243, %v1269
    %v1274 = vsel %vm1254, %v1248, %v1270
    %v1275 = vld [vmem:[%s5] sm:$0xff]
    %v1276 = vld [vmem:[%s5 + $0x8] sm:$0xff]
    %v1277 = vld [vmem:[%s5 + $0x10] sm:$0xff]
    %v1278 = vld [vmem:[%s5 + $0x18] sm:$0xff]
    %v1279 = vld [vmem:[%s5 + $0x20] sm:$0xff]
    %v1280 = vld [vmem:[%s5 + $0x28] sm:$0xff]
    %v1281 = vld [vmem:[%s5 + $0x30] sm:$0xff]
    %v1282 = vld [vmem:[%s5 + $0x38] sm:$0xff]
    %v1283 = vld [vmem:[%s5 + $0x40] sm:$0xff]
    %v1284 = vld [vmem:[%s5 + $0x48] sm:$0xff]
    %v1285 = vld [vmem:[%s5 + $0x50] sm:$0xff]
    %v1286 = vld [vmem:[%s5 + $0x58] sm:$0xff]
    %v1287 = vld [vmem:[%s5 + $0x60] sm:$0xff]
    %v1288 = vld [vmem:[%s5 + $0x68] sm:$0xff]
    %v1289 = vld [vmem:[%s5 + $0x70] sm:$0xff]
    %v1290 = vlaneseq
    %v1291 = vshrl.u32 %v1290, 7
    %v1292 = vsub.s32 3, %v1291
    %v1293 = vrot.slane %v53, %v1292
    %vm1294 = vcmask 982016
    %v1296 = vsel %vm1294, %v1271, 0
    %v1299 = vsel %vm1294, %v1272, 0
    %v1302 = vsel %vm1294, %v1273, 0
    %v1305 = vsel %vm1294, %v1274, 0
    %1307 = vmatprep.subr.mxu0 0.0
    %1308 = vmatpush1.msra.mxu0 0.0
    %1309 = vmatprep.subr.mxu0 0.0
    %1310 = vmatpush1.msra.mxu0 %v1289
    %1311 = vmatprep.subr.mxu0 0.0
    %1312 = vmatpush1.msra.mxu0 %v1288
    %1313 = vmatprep.subr.mxu0 0.0
    %1314 = vmatpush1.msra.mxu0 %v1287
    %1315 = vmatprep.subr.mxu0 0.0
    %1316 = vmatpush1.msra.mxu0 %v1286
    %1317 = vmatprep.subr.mxu0 0.0
    %1318 = vmatpush1.msra.mxu0 %v1285
    %1319 = vmatprep.subr.mxu0 0.0
    %1320 = vmatpush1.msra.mxu0 %v1284
    %1321 = vmatprep.subr.mxu0 0.0
    %1322 = vmatpush1.msra.mxu0 %v1283
    %1323 = vmatprep.subr.mxu0 0.0
    %1324 = vmatpush1.msra.mxu0 %v1282
    %1325 = vmatprep.subr.mxu0 0.0
    %1326 = vmatpush1.msra.mxu0 %v1281
    %1327 = vmatprep.subr.mxu0 0.0
    %1328 = vmatpush1.msra.mxu0 %v1280
    %1329 = vmatprep.subr.mxu0 0.0
    %1330 = vmatpush1.msra.mxu0 %v1279
    %1331 = vmatprep.subr.mxu0 0.0
    %1332 = vmatpush1.msra.mxu0 %v1278
    %1333 = vmatprep.subr.mxu0 0.0
    %1334 = vmatpush1.msra.mxu0 %v1277
    %1335 = vmatprep.subr.mxu0 0.0
    %1336 = vmatpush1.msra.mxu0 %v1276
    %1337 = vmatprep.subr.mxu0 0.0
    %1338 = vmatpush1.msra.mxu0 %v1275
    %1339 = vmatprep.subr.mxu0 0.0
    %1340 = vmatpush2.msra.mxu0 0.0
    %1341 = vmatprep.subr.mxu0 0.0
    %1342 = vmatpush2.msra.mxu0 0.0
    %1343 = vmatprep.subr.mxu0 0.0
    %1344 = vmatpush2.msra.mxu0 0.0
    %1345 = vmatprep.subr.mxu0 0.0
    %1346 = vmatpush2.msra.mxu0 0.0
    %1347 = vmatprep.subr.mxu0 0.0
    %1348 = vmatpush2.msra.mxu0 0.0
    %1349 = vmatprep.subr.mxu0 0.0
    %1350 = vmatpush2.msra.mxu0 0.0
    %1351 = vmatprep.subr.mxu0 0.0
    %1352 = vmatpush2.msra.mxu0 0.0
    %1353 = vmatprep.subr.mxu0 0.0
    %1354 = vmatpush2.msra.mxu0 0.0
    %1355 = vmatprep.subr.mxu0 0.0
    %1356 = vmatpush2.msra.mxu0 0.0
    %1357 = vmatprep.subr.mxu0 0.0
    %1358 = vmatpush2.msra.mxu0 0.0
    %1359 = vmatprep.subr.mxu0 0.0
    %1360 = vmatpush2.msra.mxu0 0.0
    %1361 = vmatprep.subr.mxu0 0.0
    %1362 = vmatpush2.msra.mxu0 0.0
    %1363 = vmatprep.subr.mxu0 0.0
    %1364 = vmatpush2.msra.mxu0 0.0
    %1365 = vmatprep.subr.mxu0 0.0
    %1366 = vmatpush2.msra.mxu0 0.0
    %1367 = vmatprep.subr.mxu0 0.0
    %1368 = vmatpush2.msra.mxu0 0.0
    %1369 = vmatprep.subr.mxu0 0.0
    %1370 = vmatpush2.msra.mxu0 0.0
    %1371 = vmatprep.mubr.f32.mxu0 0.0
    %1372 = vmatmul.mubr.f32.gmra.mxu0 %v1296
    %v1373 = vpop.f32.mrf.mxu0
    %v1374 = vadd.f32 %v1293, %v1373
    %v1375 = vpop.f32.mrf.mxu0
    %1376 = vmatprep.mubr.f32.mxu0 0.0
    %1377 = vmatmul.mubr.f32.gmra.mxu0 %v1299
    %v1378 = vpop.f32.mrf.mxu0
    %v1379 = vadd.f32 %v1293, %v1378
    %v1380 = vpop.f32.mrf.mxu0
    %1381 = vmatprep.mubr.f32.mxu0 0.0
    %1382 = vmatmul.mubr.f32.gmra.mxu0 %v1302
    %v1383 = vpop.f32.mrf.mxu0
    %v1384 = vadd.f32 %v1293, %v1383
    %v1385 = vpop.f32.mrf.mxu0
    %1386 = vmatprep.mubr.f32.mxu0 0.0
    %1387 = vmatmul.mubr.f32.gmra.mxu0 %v1305
    %v1388 = vpop.f32.mrf.mxu0
    %v1389 = vadd.f32 %v1293, %v1388
    %v1390 = vpop.f32.mrf.mxu0
    %1391 = vdwg.mxu0
    %1396 = vrot.lane.b32.xlu0 %v54, 15
    %v1397 = vpop.permute.xlu0 %1396
    %1398 = vrot.lane.b32.xlu0 %v55, 15
    %v1399 = vpop.permute.xlu0 %1398
    %1400 = vrot.lane.b32.xlu0 %v56, 15
    %v1401 = vpop.permute.xlu0 %1400
    %1402 = vrot.lane.b32.xlu0 %v57, 15
    %v1403 = vpop.permute.xlu0 %1402
    %1408 = vrot.lane.b32.xlu0 %v54, 30
    %v1409 = vpop.permute.xlu0 %1408
    %1410 = vrot.lane.b32.xlu0 %v55, 30
    %v1411 = vpop.permute.xlu0 %1410
    %1412 = vrot.lane.b32.xlu0 %v56, 30
    %v1413 = vpop.permute.xlu0 %1412
    %1414 = vrot.lane.b32.xlu0 %v57, 30
    %v1415 = vpop.permute.xlu0 %1414
    %1420 = vrot.lane.b32.xlu0 %v54, 45
    %v1421 = vpop.permute.xlu0 %1420
    %1422 = vrot.lane.b32.xlu0 %v55, 45
    %v1423 = vpop.permute.xlu0 %1422
    %1424 = vrot.lane.b32.xlu0 %v56, 45
    %v1425 = vpop.permute.xlu0 %1424
    %1426 = vrot.lane.b32.xlu0 %v57, 45
    %v1427 = vpop.permute.xlu0 %1426
    %v1432 = vsel %vm339, %v54, %v1397
    %v1433 = vsel %vm339, %v55, %v1399
    %v1434 = vsel %vm339, %v56, %v1401
    %v1435 = vsel %vm339, %v57, %v1403
    %v1436 = vsel %vm685, %v1432, %v1409
    %v1437 = vsel %vm685, %v1433, %v1411
    %v1438 = vsel %vm685, %v1434, %v1413
    %v1439 = vsel %vm685, %v1435, %v1415
    %v1440 = vsel %vm68, %v1436, %v1421
    %v1441 = vsel %vm68, %v1437, %v1423
    %v1442 = vsel %vm68, %v1438, %v1425
    %v1443 = vsel %vm68, %v1439, %v1427
    %v1444 = vmul.f32 %v1374, %v1440
    %v1445 = vmul.f32 %v1379, %v1441
    %v1446 = vmul.f32 %v1384, %v1442
    %v1447 = vmul.f32 %v1389, %v1443
    %v1448 = vtanh.pop %v1444
    %v1449 = vtanh.pop %v1445
    %v1450 = vtanh.pop %v1446
    %v1451 = vtanh.pop %v1447
    %s1452 = sld [smem:[#allocation2 + $0x18]]
    %s1453 = sld [smem:[#allocation2]]
    %v1454 = vstv %s1453
    %v1455 = vmul.f32 %v417, %v1454
    %v1456 = vmul.f32 %v1122, %v1454
    %v1457 = vmul.f32 %v1118, %v1454
    %v1458 = vmul.f32 %v1117, %v1454
    %v1459 = vstv %s1452
    %v1460 = vadd.f32 %v1459, %v1455
    %v1461 = vadd.f32 %v1459, %v1456
    %v1462 = vadd.f32 %v1459, %v1457
    %v1463 = vadd.f32 %v1459, %v1458
    %s1464 = sld [smem:[#allocation2 + $0x8]]
    %v1465 = vstv %s1464
    %v1466 = vmul.f32 %v546, %v1465
    %v1467 = vmul.f32 %v1131, %v1465
    %v1468 = vmul.f32 %v1127, %v1465
    %v1469 = vmul.f32 %v1126, %v1465
    %v1470 = vadd.f32 %v1460, %v1466
    %v1471 = vadd.f32 %v1461, %v1467
    %v1472 = vadd.f32 %v1462, %v1468
    %v1473 = vadd.f32 %v1463, %v1469
    %s1474 = sld [smem:[#allocation2 + $0x10]]
    %v1475 = vstv %s1474
    %v1476 = vmul.f32 %v675, %v1475
    %v1477 = vmul.f32 %v1140, %v1475
    %v1478 = vmul.f32 %v1136, %v1475
    %v1479 = vmul.f32 %v1135, %v1475
    %v1480 = vadd.f32 %v1470, %v1476
    %v1481 = vadd.f32 %v1471, %v1477
    %v1482 = vadd.f32 %v1472, %v1478
    %v1483 = vadd.f32 %v1473, %v1479
    %vm1484 = vcmp.gt.f32.partialorder %v1480, 0.0
    %vm1485 = vcmp.gt.f32.partialorder %v1481, 0.0
    %vm1486 = vcmp.gt.f32.partialorder %v1482, 0.0
    %vm1487 = vcmp.gt.f32.partialorder %v1483, 0.0
    %v1488 = vmin.f32 %v1480, 0.0
    %v1489 = vmin.f32 %v1481, 0.0
    %v1490 = vmin.f32 %v1482, 0.0
    %v1491 = vmin.f32 %v1483, 0.0
    %v1492 = vmul.f32 %v1488, 1.442695
    %v1493 = vpow.pop %v1492
    %v1494 = vmul.f32 %v1489, 1.442695
    %v1495 = vpow.pop %v1494
    %v1496 = vmul.f32 %v1490, 1.442695
    %v1497 = vpow.pop %v1496
    %v1498 = vmul.f32 %v1491, 1.442695
    %v1499 = vpow.pop %v1498
    %v1500 = vsub.f32 %v1493, 1.0
    %v1501 = vsub.f32 %v1495, 1.0
    %v1502 = vsub.f32 %v1497, 1.0
    %v1503 = vsub.f32 %v1499, 1.0
    %v1504 = vsel %vm1484, %v1480, %v1500
    %v1505 = vsel %vm1485, %v1481, %v1501
    %v1506 = vsel %vm1486, %v1482, %v1502
    %v1507 = vsel %vm1487, %v1483, %v1503
    %s1508 = sld [smem:[#allocation2 + $0x20]]
    %v1509 = vstv %s1508
    %v1510 = vmul.f32 %v1509, %v1504
    %v1511 = vmul.f32 %v1509, %v1505
    %v1512 = vmul.f32 %v1509, %v1506
    %v1513 = vmul.f32 %v1509, %v1507
    %s1514 = sld [smem:[#allocation2 + $0x19]]
    %s1515 = sld [smem:[#allocation2 + $0x1]]
    %v1516 = vstv %s1515
    %v1517 = vmul.f32 %v417, %v1516
    %v1518 = vmul.f32 %v1122, %v1516
    %v1519 = vmul.f32 %v1118, %v1516
    %v1520 = vmul.f32 %v1117, %v1516
    %v1521 = vstv %s1514
    %v1522 = vadd.f32 %v1521, %v1517
    %v1523 = vadd.f32 %v1521, %v1518
    %v1524 = vadd.f32 %v1521, %v1519
    %v1525 = vadd.f32 %v1521, %v1520
    %s1526 = sld [smem:[#allocation2 + $0x9]]
    %v1527 = vstv %s1526
    %v1528 = vmul.f32 %v546, %v1527
    %v1529 = vmul.f32 %v1131, %v1527
    %v1530 = vmul.f32 %v1127, %v1527
    %v1531 = vmul.f32 %v1126, %v1527
    %v1532 = vadd.f32 %v1522, %v1528
    %v1533 = vadd.f32 %v1523, %v1529
    %v1534 = vadd.f32 %v1524, %v1530
    %v1535 = vadd.f32 %v1525, %v1531
    %s1536 = sld [smem:[#allocation2 + $0x11]]
    %v1537 = vstv %s1536
    %v1538 = vmul.f32 %v675, %v1537
    %v1539 = vmul.f32 %v1140, %v1537
    %v1540 = vmul.f32 %v1136, %v1537
    %v1541 = vmul.f32 %v1135, %v1537
    %v1542 = vadd.f32 %v1532, %v1538
    %v1543 = vadd.f32 %v1533, %v1539
    %v1544 = vadd.f32 %v1534, %v1540
    %v1545 = vadd.f32 %v1535, %v1541
    %vm1546 = vcmp.gt.f32.partialorder %v1542, 0.0
    %vm1547 = vcmp.gt.f32.partialorder %v1543, 0.0
    %vm1548 = vcmp.gt.f32.partialorder %v1544, 0.0
    %vm1549 = vcmp.gt.f32.partialorder %v1545, 0.0
    %v1550 = vmin.f32 %v1542, 0.0
    %v1551 = vmin.f32 %v1543, 0.0
    %v1552 = vmin.f32 %v1544, 0.0
    %v1553 = vmin.f32 %v1545, 0.0
    %v1554 = vmul.f32 %v1550, 1.442695
    %v1555 = vpow.pop %v1554
    %v1556 = vmul.f32 %v1551, 1.442695
    %v1557 = vpow.pop %v1556
    %v1558 = vmul.f32 %v1552, 1.442695
    %v1559 = vpow.pop %v1558
    %v1560 = vmul.f32 %v1553, 1.442695
    %v1561 = vpow.pop %v1560
    %v1562 = vsub.f32 %v1555, 1.0
    %v1563 = vsub.f32 %v1557, 1.0
    %v1564 = vsub.f32 %v1559, 1.0
    %v1565 = vsub.f32 %v1561, 1.0
    %v1566 = vsel %vm1546, %v1542, %v1562
    %v1567 = vsel %vm1547, %v1543, %v1563
    %v1568 = vsel %vm1548, %v1544, %v1564
    %v1569 = vsel %vm1549, %v1545, %v1565
    %s1570 = sld [smem:[#allocation2 + $0x21]]
    %v1571 = vstv %s1570
    %v1572 = vmul.f32 %v1571, %v1566
    %v1573 = vmul.f32 %v1571, %v1567
    %v1574 = vmul.f32 %v1571, %v1568
    %v1575 = vmul.f32 %v1571, %v1569
    %v1576 = vadd.f32 %v1510, %v1572
    %v1577 = vadd.f32 %v1511, %v1573
    %v1578 = vadd.f32 %v1512, %v1574
    %v1579 = vadd.f32 %v1513, %v1575
    %s1580 = sld [smem:[#allocation2 + $0x1a]]
    %s1581 = sld [smem:[#allocation2 + $0x2]]
    %v1582 = vstv %s1581
    %v1583 = vmul.f32 %v417, %v1582
    %v1584 = vmul.f32 %v1122, %v1582
    %v1585 = vmul.f32 %v1118, %v1582
    %v1586 = vmul.f32 %v1117, %v1582
    %v1587 = vstv %s1580
    %v1588 = vadd.f32 %v1587, %v1583
    %v1589 = vadd.f32 %v1587, %v1584
    %v1590 = vadd.f32 %v1587, %v1585
    %v1591 = vadd.f32 %v1587, %v1586
    %s1592 = sld [smem:[#allocation2 + $0xa]]
    %v1593 = vstv %s1592
    %v1594 = vmul.f32 %v546, %v1593
    %v1595 = vmul.f32 %v1131, %v1593
    %v1596 = vmul.f32 %v1127, %v1593
    %v1597 = vmul.f32 %v1126, %v1593
    %v1598 = vadd.f32 %v1588, %v1594
    %v1599 = vadd.f32 %v1589, %v1595
    %v1600 = vadd.f32 %v1590, %v1596
    %v1601 = vadd.f32 %v1591, %v1597
    %s1602 = sld [smem:[#allocation2 + $0x12]]
    %v1603 = vstv %s1602
    %v1604 = vmul.f32 %v675, %v1603
    %v1605 = vmul.f32 %v1140, %v1603
    %v1606 = vmul.f32 %v1136, %v1603
    %v1607 = vmul.f32 %v1135, %v1603
    %v1608 = vadd.f32 %v1598, %v1604
    %v1609 = vadd.f32 %v1599, %v1605
    %v1610 = vadd.f32 %v1600, %v1606
    %v1611 = vadd.f32 %v1601, %v1607
    %vm1612 = vcmp.gt.f32.partialorder %v1608, 0.0
    %vm1613 = vcmp.gt.f32.partialorder %v1609, 0.0
    %vm1614 = vcmp.gt.f32.partialorder %v1610, 0.0
    %vm1615 = vcmp.gt.f32.partialorder %v1611, 0.0
    %v1616 = vmin.f32 %v1608, 0.0
    %v1617 = vmin.f32 %v1609, 0.0
    %v1618 = vmin.f32 %v1610, 0.0
    %v1619 = vmin.f32 %v1611, 0.0
    %v1620 = vmul.f32 %v1616, 1.442695
    %v1621 = vpow.pop %v1620
    %v1622 = vmul.f32 %v1617, 1.442695
    %v1623 = vpow.pop %v1622
    %v1624 = vmul.f32 %v1618, 1.442695
    %v1625 = vpow.pop %v1624
    %v1626 = vmul.f32 %v1619, 1.442695
    %v1627 = vpow.pop %v1626
    %v1628 = vsub.f32 %v1621, 1.0
    %v1629 = vsub.f32 %v1623, 1.0
    %v1630 = vsub.f32 %v1625, 1.0
    %v1631 = vsub.f32 %v1627, 1.0
    %v1632 = vsel %vm1612, %v1608, %v1628
    %v1633 = vsel %vm1613, %v1609, %v1629
    %v1634 = vsel %vm1614, %v1610, %v1630
    %v1635 = vsel %vm1615, %v1611, %v1631
    %s1636 = sld [smem:[#allocation2 + $0x22]]
    %v1637 = vstv %s1636
    %v1638 = vmul.f32 %v1637, %v1632
    %v1639 = vmul.f32 %v1637, %v1633
    %v1640 = vmul.f32 %v1637, %v1634
    %v1641 = vmul.f32 %v1637, %v1635
    %v1642 = vadd.f32 %v1576, %v1638
    %v1643 = vadd.f32 %v1577, %v1639
    %v1644 = vadd.f32 %v1578, %v1640
    %v1645 = vadd.f32 %v1579, %v1641
    %s1646 = sld [smem:[#allocation2 + $0x1b]]
    %s1647 = sld [smem:[#allocation2 + $0x3]]
    %v1648 = vstv %s1647
    %v1649 = vmul.f32 %v417, %v1648
    %v1650 = vmul.f32 %v1122, %v1648
    %v1651 = vmul.f32 %v1118, %v1648
    %v1652 = vmul.f32 %v1117, %v1648
    %v1653 = vstv %s1646
    %v1654 = vadd.f32 %v1653, %v1649
    %v1655 = vadd.f32 %v1653, %v1650
    %v1656 = vadd.f32 %v1653, %v1651
    %v1657 = vadd.f32 %v1653, %v1652
    %s1658 = sld [smem:[#allocation2 + $0xb]]
    %v1659 = vstv %s1658
    %v1660 = vmul.f32 %v546, %v1659
    %v1661 = vmul.f32 %v1131, %v1659
    %v1662 = vmul.f32 %v1127, %v1659
    %v1663 = vmul.f32 %v1126, %v1659
    %v1664 = vadd.f32 %v1654, %v1660
    %v1665 = vadd.f32 %v1655, %v1661
    %v1666 = vadd.f32 %v1656, %v1662
    %v1667 = vadd.f32 %v1657, %v1663
    %s1668 = sld [smem:[#allocation2 + $0x13]]
    %v1669 = vstv %s1668
    %v1670 = vmul.f32 %v675, %v1669
    %v1671 = vmul.f32 %v1140, %v1669
    %v1672 = vmul.f32 %v1136, %v1669
    %v1673 = vmul.f32 %v1135, %v1669
    %v1674 = vadd.f32 %v1664, %v1670
    %v1675 = vadd.f32 %v1665, %v1671
    %v1676 = vadd.f32 %v1666, %v1672
    %v1677 = vadd.f32 %v1667, %v1673
    %vm1678 = vcmp.gt.f32.partialorder %v1674, 0.0
    %vm1679 = vcmp.gt.f32.partialorder %v1675, 0.0
    %vm1680 = vcmp.gt.f32.partialorder %v1676, 0.0
    %vm1681 = vcmp.gt.f32.partialorder %v1677, 0.0
    %v1682 = vmin.f32 %v1674, 0.0
    %v1683 = vmin.f32 %v1675, 0.0
    %v1684 = vmin.f32 %v1676, 0.0
    %v1685 = vmin.f32 %v1677, 0.0
    %v1686 = vmul.f32 %v1682, 1.442695
    %v1687 = vpow.pop %v1686
    %v1688 = vmul.f32 %v1683, 1.442695
    %v1689 = vpow.pop %v1688
    %v1690 = vmul.f32 %v1684, 1.442695
    %v1691 = vpow.pop %v1690
    %v1692 = vmul.f32 %v1685, 1.442695
    %v1693 = vpow.pop %v1692
    %v1694 = vsub.f32 %v1687, 1.0
    %v1695 = vsub.f32 %v1689, 1.0
    %v1696 = vsub.f32 %v1691, 1.0
    %v1697 = vsub.f32 %v1693, 1.0
    %v1698 = vsel %vm1678, %v1674, %v1694
    %v1699 = vsel %vm1679, %v1675, %v1695
    %v1700 = vsel %vm1680, %v1676, %v1696
    %v1701 = vsel %vm1681, %v1677, %v1697
    %s1702 = sld [smem:[#allocation2 + $0x23]]
    %v1703 = vstv %s1702
    %v1704 = vmul.f32 %v1703, %v1698
    %v1705 = vmul.f32 %v1703, %v1699
    %v1706 = vmul.f32 %v1703, %v1700
    %v1707 = vmul.f32 %v1703, %v1701
    %v1708 = vadd.f32 %v1642, %v1704
    %v1709 = vadd.f32 %v1643, %v1705
    %v1710 = vadd.f32 %v1644, %v1706
    %v1711 = vadd.f32 %v1645, %v1707
    %s1712 = sld [smem:[#allocation2 + $0x1c]]
    %s1713 = sld [smem:[#allocation2 + $0x4]]
    %v1714 = vstv %s1713
    %v1715 = vmul.f32 %v417, %v1714
    %v1716 = vmul.f32 %v1122, %v1714
    %v1717 = vmul.f32 %v1118, %v1714
    %v1718 = vmul.f32 %v1117, %v1714
    %v1719 = vstv %s1712
    %v1720 = vadd.f32 %v1719, %v1715
    %v1721 = vadd.f32 %v1719, %v1716
    %v1722 = vadd.f32 %v1719, %v1717
    %v1723 = vadd.f32 %v1719, %v1718
    %s1724 = sld [smem:[#allocation2 + $0xc]]
    %v1725 = vstv %s1724
    %v1726 = vmul.f32 %v546, %v1725
    %v1727 = vmul.f32 %v1131, %v1725
    %v1728 = vmul.f32 %v1127, %v1725
    %v1729 = vmul.f32 %v1126, %v1725
    %v1730 = vadd.f32 %v1720, %v1726
    %v1731 = vadd.f32 %v1721, %v1727
    %v1732 = vadd.f32 %v1722, %v1728
    %v1733 = vadd.f32 %v1723, %v1729
    %s1734 = sld [smem:[#allocation2 + $0x14]]
    %v1735 = vstv %s1734
    %v1736 = vmul.f32 %v675, %v1735
    %v1737 = vmul.f32 %v1140, %v1735
    %v1738 = vmul.f32 %v1136, %v1735
    %v1739 = vmul.f32 %v1135, %v1735
    %v1740 = vadd.f32 %v1730, %v1736
    %v1741 = vadd.f32 %v1731, %v1737
    %v1742 = vadd.f32 %v1732, %v1738
    %v1743 = vadd.f32 %v1733, %v1739
    %vm1744 = vcmp.gt.f32.partialorder %v1740, 0.0
    %vm1745 = vcmp.gt.f32.partialorder %v1741, 0.0
    %vm1746 = vcmp.gt.f32.partialorder %v1742, 0.0
    %vm1747 = vcmp.gt.f32.partialorder %v1743, 0.0
    %v1748 = vmin.f32 %v1740, 0.0
    %v1749 = vmin.f32 %v1741, 0.0
    %v1750 = vmin.f32 %v1742, 0.0
    %v1751 = vmin.f32 %v1743, 0.0
    %v1752 = vmul.f32 %v1748, 1.442695
    %v1753 = vpow.pop %v1752
    %v1754 = vmul.f32 %v1749, 1.442695
    %v1755 = vpow.pop %v1754
    %v1756 = vmul.f32 %v1750, 1.442695
    %v1757 = vpow.pop %v1756
    %v1758 = vmul.f32 %v1751, 1.442695
    %v1759 = vpow.pop %v1758
    %v1760 = vsub.f32 %v1753, 1.0
    %v1761 = vsub.f32 %v1755, 1.0
    %v1762 = vsub.f32 %v1757, 1.0
    %v1763 = vsub.f32 %v1759, 1.0
    %v1764 = vsel %vm1744, %v1740, %v1760
    %v1765 = vsel %vm1745, %v1741, %v1761
    %v1766 = vsel %vm1746, %v1742, %v1762
    %v1767 = vsel %vm1747, %v1743, %v1763
    %s1768 = sld [smem:[#allocation2 + $0x24]]
    %v1769 = vstv %s1768
    %v1770 = vmul.f32 %v1769, %v1764
    %v1771 = vmul.f32 %v1769, %v1765
    %v1772 = vmul.f32 %v1769, %v1766
    %v1773 = vmul.f32 %v1769, %v1767
    %v1774 = vadd.f32 %v1708, %v1770
    %v1775 = vadd.f32 %v1709, %v1771
    %v1776 = vadd.f32 %v1710, %v1772
    %v1777 = vadd.f32 %v1711, %v1773
    %s1778 = sld [smem:[#allocation2 + $0x1d]]
    %s1779 = sld [smem:[#allocation2 + $0x5]]
    %v1780 = vstv %s1779
    %v1781 = vmul.f32 %v417, %v1780
    %v1782 = vmul.f32 %v1122, %v1780
    %v1783 = vmul.f32 %v1118, %v1780
    %v1784 = vmul.f32 %v1117, %v1780
    %v1785 = vstv %s1778
    %v1786 = vadd.f32 %v1785, %v1781
    %v1787 = vadd.f32 %v1785, %v1782
    %v1788 = vadd.f32 %v1785, %v1783
    %v1789 = vadd.f32 %v1785, %v1784
    %s1790 = sld [smem:[#allocation2 + $0xd]]
    %v1791 = vstv %s1790
    %v1792 = vmul.f32 %v546, %v1791
    %v1793 = vmul.f32 %v1131, %v1791
    %v1794 = vmul.f32 %v1127, %v1791
    %v1795 = vmul.f32 %v1126, %v1791
    %v1796 = vadd.f32 %v1786, %v1792
    %v1797 = vadd.f32 %v1787, %v1793
    %v1798 = vadd.f32 %v1788, %v1794
    %v1799 = vadd.f32 %v1789, %v1795
    %s1800 = sld [smem:[#allocation2 + $0x15]]
    %v1801 = vstv %s1800
    %v1802 = vmul.f32 %v675, %v1801
    %v1803 = vmul.f32 %v1140, %v1801
    %v1804 = vmul.f32 %v1136, %v1801
    %v1805 = vmul.f32 %v1135, %v1801
    %v1806 = vadd.f32 %v1796, %v1802
    %v1807 = vadd.f32 %v1797, %v1803
    %v1808 = vadd.f32 %v1798, %v1804
    %v1809 = vadd.f32 %v1799, %v1805
    %vm1810 = vcmp.gt.f32.partialorder %v1806, 0.0
    %vm1811 = vcmp.gt.f32.partialorder %v1807, 0.0
    %vm1812 = vcmp.gt.f32.partialorder %v1808, 0.0
    %vm1813 = vcmp.gt.f32.partialorder %v1809, 0.0
    %v1814 = vmin.f32 %v1806, 0.0
    %v1815 = vmin.f32 %v1807, 0.0
    %v1816 = vmin.f32 %v1808, 0.0
    %v1817 = vmin.f32 %v1809, 0.0
    %v1818 = vmul.f32 %v1814, 1.442695
    %v1819 = vpow.pop %v1818
    %v1820 = vmul.f32 %v1815, 1.442695
    %v1821 = vpow.pop %v1820
    %v1822 = vmul.f32 %v1816, 1.442695
    %v1823 = vpow.pop %v1822
    %v1824 = vmul.f32 %v1817, 1.442695
    %v1825 = vpow.pop %v1824
    %v1826 = vsub.f32 %v1819, 1.0
    %v1827 = vsub.f32 %v1821, 1.0
    %v1828 = vsub.f32 %v1823, 1.0
    %v1829 = vsub.f32 %v1825, 1.0
    %v1830 = vsel %vm1810, %v1806, %v1826
    %v1831 = vsel %vm1811, %v1807, %v1827
    %v1832 = vsel %vm1812, %v1808, %v1828
    %v1833 = vsel %vm1813, %v1809, %v1829
    %s1834 = sld [smem:[#allocation2 + $0x25]]
    %v1835 = vstv %s1834
    %v1836 = vmul.f32 %v1835, %v1830
    %v1837 = vmul.f32 %v1835, %v1831
    %v1838 = vmul.f32 %v1835, %v1832
    %v1839 = vmul.f32 %v1835, %v1833
    %v1840 = vadd.f32 %v1774, %v1836
    %v1841 = vadd.f32 %v1775, %v1837
    %v1842 = vadd.f32 %v1776, %v1838
    %v1843 = vadd.f32 %v1777, %v1839
    %s1844 = sld [smem:[#allocation2 + $0x1e]]
    %s1845 = sld [smem:[#allocation2 + $0x6]]
    %v1846 = vstv %s1845
    %v1847 = vmul.f32 %v417, %v1846
    %v1848 = vmul.f32 %v1122, %v1846
    %v1849 = vmul.f32 %v1118, %v1846
    %v1850 = vmul.f32 %v1117, %v1846
    %v1851 = vstv %s1844
    %v1852 = vadd.f32 %v1851, %v1847
    %v1853 = vadd.f32 %v1851, %v1848
    %v1854 = vadd.f32 %v1851, %v1849
    %v1855 = vadd.f32 %v1851, %v1850
    %s1856 = sld [smem:[#allocation2 + $0xe]]
    %v1857 = vstv %s1856
    %v1858 = vmul.f32 %v546, %v1857
    %v1859 = vmul.f32 %v1131, %v1857
    %v1860 = vmul.f32 %v1127, %v1857
    %v1861 = vmul.f32 %v1126, %v1857
    %v1862 = vadd.f32 %v1852, %v1858
    %v1863 = vadd.f32 %v1853, %v1859
    %v1864 = vadd.f32 %v1854, %v1860
    %v1865 = vadd.f32 %v1855, %v1861
    %s1866 = sld [smem:[#allocation2 + $0x16]]
    %v1867 = vstv %s1866
    %v1868 = vmul.f32 %v675, %v1867
    %v1869 = vmul.f32 %v1140, %v1867
    %v1870 = vmul.f32 %v1136, %v1867
    %v1871 = vmul.f32 %v1135, %v1867
    %v1872 = vadd.f32 %v1862, %v1868
    %v1873 = vadd.f32 %v1863, %v1869
    %v1874 = vadd.f32 %v1864, %v1870
    %v1875 = vadd.f32 %v1865, %v1871
    %vm1876 = vcmp.gt.f32.partialorder %v1872, 0.0
    %vm1877 = vcmp.gt.f32.partialorder %v1873, 0.0
    %vm1878 = vcmp.gt.f32.partialorder %v1874, 0.0
    %vm1879 = vcmp.gt.f32.partialorder %v1875, 0.0
    %v1880 = vmin.f32 %v1872, 0.0
    %v1881 = vmin.f32 %v1873, 0.0
    %v1882 = vmin.f32 %v1874, 0.0
    %v1883 = vmin.f32 %v1875, 0.0
    %v1884 = vmul.f32 %v1880, 1.442695
    %v1885 = vpow.pop %v1884
    %v1886 = vmul.f32 %v1881, 1.442695
    %v1887 = vpow.pop %v1886
    %v1888 = vmul.f32 %v1882, 1.442695
    %v1889 = vpow.pop %v1888
    %v1890 = vmul.f32 %v1883, 1.442695
    %v1891 = vpow.pop %v1890
    %v1892 = vsub.f32 %v1885, 1.0
    %v1893 = vsub.f32 %v1887, 1.0
    %v1894 = vsub.f32 %v1889, 1.0
    %v1895 = vsub.f32 %v1891, 1.0
    %v1896 = vsel %vm1876, %v1872, %v1892
    %v1897 = vsel %vm1877, %v1873, %v1893
    %v1898 = vsel %vm1878, %v1874, %v1894
    %v1899 = vsel %vm1879, %v1875, %v1895
    %s1900 = sld [smem:[#allocation2 + $0x26]]
    %v1901 = vstv %s1900
    %v1902 = vmul.f32 %v1901, %v1896
    %v1903 = vmul.f32 %v1901, %v1897
    %v1904 = vmul.f32 %v1901, %v1898
    %v1905 = vmul.f32 %v1901, %v1899
    %v1906 = vadd.f32 %v1840, %v1902
    %v1907 = vadd.f32 %v1841, %v1903
    %v1908 = vadd.f32 %v1842, %v1904
    %v1909 = vadd.f32 %v1843, %v1905
    %s1910 = sld [smem:[#allocation2 + $0x1f]]
    %s1911 = sld [smem:[#allocation2 + $0x7]]
    %v1912 = vstv %s1911
    %v1913 = vmul.f32 %v417, %v1912
    %v1914 = vmul.f32 %v1122, %v1912
    %v1915 = vmul.f32 %v1118, %v1912
    %v1916 = vmul.f32 %v1117, %v1912
    %v1917 = vstv %s1910
    %v1918 = vadd.f32 %v1917, %v1913
    %v1919 = vadd.f32 %v1917, %v1914
    %v1920 = vadd.f32 %v1917, %v1915
    %v1921 = vadd.f32 %v1917, %v1916
    %s1922 = sld [smem:[#allocation2 + $0xf]]
    %v1923 = vstv %s1922
    %v1924 = vmul.f32 %v546, %v1923
    %v1925 = vmul.f32 %v1131, %v1923
    %v1926 = vmul.f32 %v1127, %v1923
    %v1927 = vmul.f32 %v1126, %v1923
    %v1928 = vadd.f32 %v1918, %v1924
    %v1929 = vadd.f32 %v1919, %v1925
    %v1930 = vadd.f32 %v1920, %v1926
    %v1931 = vadd.f32 %v1921, %v1927
    %s1932 = sld [smem:[#allocation2 + $0x17]]
    %v1933 = vstv %s1932
    %v1934 = vmul.f32 %v675, %v1933
    %v1935 = vmul.f32 %v1140, %v1933
    %v1936 = vmul.f32 %v1136, %v1933
    %v1937 = vmul.f32 %v1135, %v1933
    %v1938 = vadd.f32 %v1928, %v1934
    %v1939 = vadd.f32 %v1929, %v1935
    %v1940 = vadd.f32 %v1930, %v1936
    %v1941 = vadd.f32 %v1931, %v1937
    %vm1942 = vcmp.gt.f32.partialorder %v1938, 0.0
    %vm1943 = vcmp.gt.f32.partialorder %v1939, 0.0
    %vm1944 = vcmp.gt.f32.partialorder %v1940, 0.0
    %vm1945 = vcmp.gt.f32.partialorder %v1941, 0.0
    %v1946 = vmin.f32 %v1938, 0.0
    %v1947 = vmin.f32 %v1939, 0.0
    %v1948 = vmin.f32 %v1940, 0.0
    %v1949 = vmin.f32 %v1941, 0.0
    %v1950 = vmul.f32 %v1946, 1.442695
    %v1951 = vpow.pop %v1950
    %v1952 = vmul.f32 %v1947, 1.442695
    %v1953 = vpow.pop %v1952
    %v1954 = vmul.f32 %v1948, 1.442695
    %v1955 = vpow.pop %v1954
    %v1956 = vmul.f32 %v1949, 1.442695
    %v1957 = vpow.pop %v1956
    %v1958 = vsub.f32 %v1951, 1.0
    %v1959 = vsub.f32 %v1953, 1.0
    %v1960 = vsub.f32 %v1955, 1.0
    %v1961 = vsub.f32 %v1957, 1.0
    %v1962 = vsel %vm1942, %v1938, %v1958
    %v1963 = vsel %vm1943, %v1939, %v1959
    %v1964 = vsel %vm1944, %v1940, %v1960
    %v1965 = vsel %vm1945, %v1941, %v1961
    %s1966 = sld [smem:[#allocation2 + $0x27]]
    %v1967 = vstv %s1966
    %v1968 = vmul.f32 %v1967, %v1962
    %v1969 = vmul.f32 %v1967, %v1963
    %v1970 = vmul.f32 %v1967, %v1964
    %v1971 = vmul.f32 %v1967, %v1965
    %v1972 = vadd.f32 %v1906, %v1968
    %v1973 = vadd.f32 %v1907, %v1969
    %v1974 = vadd.f32 %v1908, %v1970
    %v1975 = vadd.f32 %v1909, %v1971
    %s1976 = sld [smem:[#allocation2 + $0x28]]
    %v1977 = vstv %s1976
    %v1978 = vadd.f32 %v1972, %v1977
    %v1979 = vadd.f32 %v1973, %v1977
    %v1980 = vadd.f32 %v1974, %v1977
    %v1981 = vadd.f32 %v1975, %v1977
    %1982 = vrot.lane.b32.xlu0 %v54, 113
    %v1983 = vpop.permute.xlu0 %1982
    %1984 = vrot.lane.b32.xlu0 %v55, 113
    %v1985 = vpop.permute.xlu0 %1984
    %1986 = vrot.lane.b32.xlu0 %v56, 113
    %v1987 = vpop.permute.xlu0 %1986
    %1988 = vrot.lane.b32.xlu0 %v57, 113
    %v1989 = vpop.permute.xlu0 %1988
    %v1994 = vmul.f32 %v1978, %v1983
    %v1995 = vmul.f32 %v1979, %v1985
    %v1996 = vmul.f32 %v1980, %v1987
    %v1997 = vmul.f32 %v1981, %v1989
    %2002 = vrot.lane.b32.xlu0 %v1994, 60
    %v2003 = vpop.permute.xlu0 %2002
    %2004 = vrot.lane.b32.xlu0 %v1995, 60
    %v2005 = vpop.permute.xlu0 %2004
    %2006 = vrot.lane.b32.xlu0 %v1996, 60
    %v2007 = vpop.permute.xlu0 %2006
    %2008 = vrot.lane.b32.xlu0 %v1997, 60
    %v2009 = vpop.permute.xlu0 %2008
    %vm2014 = vcmask 490496
    %v2015 = vsel %vm2014, %v1448, %v2003
    %v2016 = vsel %vm2014, %v1449, %v2005
    %v2017 = vsel %vm2014, %v1450, %v2007
    %v2018 = vsel %vm2014, %v1451, %v2009
    %vm2019 = vcmask 777216
    %v2020 = vsel %vm2019, %v2015, 0.0
    %v2021 = vsel %vm2019, %v2016, 0.0
    %v2022 = vsel %vm2019, %v2017, 0.0
    %v2023 = vsel %vm2019, %v2018, 0.0
    %2024 = vst [vmem:[%s9] sm:$0xff] %v2020
    %2025 = vst [vmem:[%s9 + $0x8] sm:$0xff] %v2021
    %2026 = vst [vmem:[%s9 + $0x10] sm:$0xff] %v2022
    %2027 = vst [vmem:[%s9 + $0x18] sm:$0x3f] %v2023
    // Predicated region
    $region42: #{hodge_baseline_layer.1} parent=1 // pred_check
      _
    $region43: #{hodge_baseline_layer.1} parent=1 // pred_check_branch
      %2029 = sbr.rel (0) target = $region45
    $region44: #{hodge_baseline_layer.1} parent=1 // pred_region
      _
    $region45: #{hodge_baseline_layer.1} parent=1 // pred_fallthru
      _
    // Predicated region
    $region46: #{hodge_baseline_layer.1} parent=1 // pred_check
      _
    $region47: #{hodge_baseline_layer.1} parent=1 // pred_check_branch
      %2031 = sbr.rel (0) target = $region49
    $region48: #{hodge_baseline_layer.1} parent=1 // pred_region
      _
    $region49: #{hodge_baseline_layer.1} parent=1 // pred_fallthru
      _
    %2032 = vsyncpa [#allocation3], 1

</llo_original>
